<compile_context>
chip_gen: v5e
topology: v5e:2x2
jax: 0.10.0
libtpu: 0.0.40
codegen_flags: <defaults>
</compile_context>

<pallas_src>
import functools

import jax
import jax.numpy as jnp
from jax.experimental import pallas as pl
from jax.experimental.pallas import tpu as pltpu


def _round_up(a, b):
    return (a + b - 1) // b * b


def _next_pow2(x):
    return 1 << (int(x) - 1).bit_length()


def _textcnn_kernel(x_ref, w1_ref, b1_ref, w2_ref, b2_ref, o_ref, *, sent_len, s_pad):
    # x_ref block: (M, E) = (TN * S_PAD, E) bf16; each sentence occupies an
    # S_PAD-row slot with its tokens at slot rows [2, 2+S) and zeros elsewhere.
    m, e = x_ref.shape
    tn = o_ref.shape[0]
    S = sent_len

    # (M, 1) validity mask: slot rows [0, S) are real conv-output positions.
    # s_pad is a power of two (asserted in the wrapper), so `&` works as `%`.
    row = jax.lax.broadcasted_iota(jnp.int32, (m, 1), 0)
    valid = (row & (s_pad - 1)) < S                       # (M, 1), broadcasts

    def shift_up(a, k):
        # result[r] = a[(r + k) % m]; wrap-around only lands in masked rows.
        if k == 0:
            return a
        return pltpu.roll(a, shift=(-k) % m, axis=0)      # XLU sublane rotate

    x = x_ref[...]                                        # (M, E) bf16 MXU LHS

    # ---- conv1: kernel (5, E), padding (2, 0).
    #   acc1[r] = sum_k x[r+k] @ w1[k] = sum_k shift_up(x @ w1[k], k)
    acc1 = jnp.dot(x, w1_ref[0], preferred_element_type=jnp.float32)
    for k in range(1, 5):
        p_k = jnp.dot(x, w1_ref[k], preferred_element_type=jnp.float32)
        acc1 = acc1 + shift_up(p_k, k)

    # Bias + ReLU + zero the junk/halo rows; the zeros double as conv2's
    # zero padding at sentence positions -1 and S.  (torch's permute(0,3,2,1)
    # is the identity in this layout.)
    h1 = jnp.maximum(jnp.where(valid, acc1 + b1_ref[...], 0.0), 0.0)   # f32
    h1b = h1.astype(jnp.bfloat16)                         # single cast for MXU

    # ---- conv2: kernel (3, E), padding (1, 0).
    #   acc2[r] = h1[r-1] @ w2[0] + h1[r] @ w2[1] + h1[r+1] @ w2[2]
    q0 = jnp.dot(h1b, w2_ref[0], preferred_element_type=jnp.float32)
    q1 = jnp.dot(h1b, w2_ref[1], preferred_element_type=jnp.float32)
    q2 = jnp.dot(h1b, w2_ref[2], preferred_element_type=jnp.float32)
    acc2 = shift_up(q0, -1) + q1 + shift_up(q2, 1)

    # ---- max_pool2d over the sentence axis, then ReLU (relu is monotonic, so
    # relu(max(z)) == max(relu(z))).  Junk rows are excluded with -inf.
    z = jnp.where(valid, acc2 + b2_ref[...], -jnp.inf)
    pooled = jnp.max(z.reshape(tn, s_pad, e), axis=1)     # (TN, E)
    o_ref[...] = jnp.maximum(pooled, 0.0)


def textcnn_forward(tokens, emb, w1, b1, w2, b2, *,
                    doc_len, sent_len, emb_dim, tn=256):
    """tokens: (batch, doc_len, sent_len) int32 -> (batch, doc_len, emb_dim) f32."""
    B = tokens.shape[0]
    S, E = sent_len, emb_dim
    N = B * doc_len

    # Sentence slot length: >= S + 4 (conv1 halo), power of two (mask uses &).
    S_PAD = _next_pow2(max(S + 4, 16))
    assert S_PAD & (S_PAD - 1) == 0 and S_PAD >= S + 4

    # Sentences per grid step: multiple of 8, capped by `tn`, and capped so the
    # ("parallel",) grid has >= 2 steps when there are >= 16 sentences, so both
    # v7x TensorCores get work (no-op on single-core v5e/v6e).
    TN = min(tn, _round_up(N, 8))
    if N >= 16:
        TN = min(TN, _round_up((N + 1) // 2, 8))
    TN = _round_up(max(TN, 8), 8)
    N_pad = _round_up(N, TN)
    M = TN * S_PAD

    # Slot-padded bf16 activations via a single fused gather: padding slots
    # index a sentinel all-zero row appended to the bf16 table (no reliance on
    # emb[0] being zero, no separate zeros/.at[].set() materialization).
    vocab = emb.shape[0]
    emb_bf = jnp.concatenate(
        [emb.astype(jnp.bfloat16), jnp.zeros((1, E), jnp.bfloat16)], axis=0)
    tok = jnp.full((N_pad, S_PAD), vocab, dtype=jnp.int32)
    tok = tok.at[:N, 2:2 + S].set(tokens.reshape(N, S).astype(jnp.int32))
    x_flat = emb_bf[tok].reshape(N_pad * S_PAD, E)
    # TODO(synk): fuse the embedding gather into the kernel (DMA int32 tokens +
    # resident emb table) to cut v5e HBM traffic further.

    w1b = w1.astype(jnp.bfloat16)                         # (5, E, E)
    w2b = w2.astype(jnp.bfloat16)                         # (3, E, E)
    b1f = b1.astype(jnp.float32).reshape(1, E)
    b2f = b2.astype(jnp.float32).reshape(1, E)

    kernel = functools.partial(_textcnn_kernel, sent_len=S, s_pad=S_PAD)

    out = pl.pallas_call(
        kernel,
        out_shape=jax.ShapeDtypeStruct((N_pad, E), jnp.float32),
        grid=(N_pad // TN,),
        in_specs=[
            # Flattened sentence slots. If the input DMA is exposed on v5e,
            # add pipeline_mode=pl.Buffered(3) here.
            pl.BlockSpec((M, E), lambda n: (n, 0)),
            pl.BlockSpec((5, E, E), lambda n: (0, 0, 0)),  # conv1 taps (resident)
            pl.BlockSpec((1, E), lambda n: (0, 0)),        # conv1 bias
            pl.BlockSpec((3, E, E), lambda n: (0, 0, 0)),  # conv2 taps (resident)
            pl.BlockSpec((1, E), lambda n: (0, 0)),        # conv2 bias
        ],
        out_specs=pl.BlockSpec((TN, E), lambda n: (n, 0)),
        compiler_params=pltpu.CompilerParams(
            dimension_semantics=("parallel",),
            vmem_limit_bytes=32 * 1024 * 1024),
    )(x_flat, w1b, b1f, w2b, b2f)

    return out[:N].reshape(B, doc_len, E)


def reference_forward(tokens, emb, w1, b1, w2, b2, *, doc_len, sent_len, emb_dim):
    """Pure-JAX f32 reference matching the PyTorch module semantics."""
    B = tokens.shape[0]
    S, E = sent_len, emb_dim
    N = B * doc_len
    x = emb[tokens].reshape(N, S, E).astype(jnp.float32)

    xp = jnp.pad(x, ((0, 0), (2, 2), (0, 0)))
    acc1 = sum(jnp.einsum("nse,eo->nso", xp[:, k:k + S], w1[k]) for k in range(5))
    h1 = jax.nn.relu(acc1 + b1[None])

    hp = jnp.pad(h1, ((0, 0), (1, 1), (0, 0)))
    acc2 = sum(jnp.einsum("nse,eo->nso", hp[:, k:k + S], w2[k]) for k in range(3))
    h2 = jax.nn.relu(acc2 + b2[None])

    return jnp.max(h2, axis=1).reshape(B, doc_len, E)


if __name__ == "__main__":
    # Small shapes consistent with the module; doc_len=7 + tn=8 exercises both
    # a multi-step grid and the N -> N_pad padding path.
    n_word, emb_dim, doc_len, sent_len, batch = 50, 32, 7, 8, 2

    key = jax.random.PRNGKey(0)
    k_emb, k_w1, k_b1, k_w2, k_b2, k_tok = jax.random.split(key, 6)

    # nn.Embedding(n_word, emb_dim, padding_idx=0): row 0 zeroed.
    emb = (0.1 * jax.random.normal(k_emb, (n_word, emb_dim), jnp.float32)
           ).at[0].set(0.0)

    # Conv weights stored as (K, E_in, E_out) == torch weight[c_out, 0, k, e_in]
    # transposed; biases as (1, E).
    w1 = jax.random.normal(k_w1, (5, emb_dim, emb_dim), jnp.float32) / jnp.sqrt(5.0 * emb_dim)
    b1 = 0.01 * jax.random.normal(k_b1, (1, emb_dim), jnp.float32)
    w2 = jax.random.normal(k_w2, (3, emb_dim, emb_dim), jnp.float32) / jnp.sqrt(3.0 * emb_dim)
    b2 = 0.01 * jax.random.normal(k_b2, (1, emb_dim), jnp.float32)

    tokens = jax.random.randint(k_tok, (batch, doc_len, sent_len), 0, n_word, jnp.int32)

    out = textcnn_forward(tokens, emb, w1, b1, w2, b2,
                          doc_len=doc_len, sent_len=sent_len, emb_dim=emb_dim, tn=8)
    out = jax.block_until_ready(out)

    ref = reference_forward(tokens, emb, w1, b1, w2, b2,
                            doc_len=doc_len, sent_len=sent_len, emb_dim=emb_dim)

    assert out.shape == (batch, doc_len, emb_dim)
    # bf16 MXU operands with f32 accumulation -> relaxed tolerance vs f32 reference.
    assert jnp.allclose(out, ref, atol=1e-2, rtol=1e-2), "mismatch vs reference"

    print("KERNEL_OK")
</pallas_src>

<mosaic_0001>
module attributes {stable_mosaic.version = 11 : i64} {
  func.func @_textcnn_kernel(%arg0: i32, %arg1: memref<128x32xbf16, #tpu.memory_space<vmem>>, %arg2: memref<5x32x32xbf16, #tpu.memory_space<vmem>>, %arg3: memref<1x32xf32, #tpu.memory_space<vmem>>, %arg4: memref<3x32x32xbf16, #tpu.memory_space<vmem>>, %arg5: memref<1x32xf32, #tpu.memory_space<vmem>>, %arg6: memref<8x32xf32, #tpu.memory_space<vmem>>) attributes {dimension_semantics = [#tpu.dimension_semantics<parallel>], iteration_bounds = array<i64: 2>, scalar_prefetch = 0 : i64, scratch_operands = 0 : i64, tpu.core_type = #tpu.core_type<tc>, window_params = [{transform_indices = @transform_0, window_bounds = array<i64: 128, 32>}, {pipeline_mode = #tpu.pipeline_mode<synchronous>, transform_indices = @transform_1, window_bounds = array<i64: 5, 32, 32>}, {pipeline_mode = #tpu.pipeline_mode<synchronous>, transform_indices = @transform_2, window_bounds = array<i64: 1, 32>}, {pipeline_mode = #tpu.pipeline_mode<synchronous>, transform_indices = @transform_3, window_bounds = array<i64: 3, 32, 32>}, {pipeline_mode = #tpu.pipeline_mode<synchronous>, transform_indices = @transform_4, window_bounds = array<i64: 1, 32>}, {transform_indices = @transform_5, window_bounds = array<i64: 8, 32>}]} {
    %0 = tpu.iota {dimensions = array<i32: 0>} : vector<128x1xi32>
    %c15_i32 = arith.constant 15 : i32
    %1 = vector.broadcast %c15_i32 : i32 to vector<128x1xi32>
    %2 = arith.andi %0, %1 : vector<128x1xi32>
    %c8_i32 = arith.constant 8 : i32
    %3 = vector.broadcast %c8_i32 : i32 to vector<128x1xi32>
    %4 = arith.cmpi slt, %2, %3 : vector<128x1xi32>
    %c0 = arith.constant 0 : index
    %c0_0 = arith.constant 0 : index
    %5 = vector.load %arg1[%c0, %c0_0] : memref<128x32xbf16, #tpu.memory_space<vmem>>, vector<128x32xbf16>
    %c0_1 = arith.constant 0 : index
    %c0_2 = arith.constant 0 : index
    %c0_3 = arith.constant 0 : index
    %6 = vector.load %arg2[%c0_1, %c0_2, %c0_3] : memref<5x32x32xbf16, #tpu.memory_space<vmem>>, vector<1x32x32xbf16>
    %7 = vector.shape_cast %6 : vector<1x32x32xbf16> to vector<32x32xbf16>
    %cst = arith.constant dense<0.000000e+00> : vector<128x32xf32>
    %8 = tpu.matmul %5, %7, %cst {dimension_numbers = #tpu.dot_dimension_numbers<[1], [0], [0], [1], [0, 0, 1, 1], [], []>} : vector<128x32xbf16>, vector<32x32xbf16>, vector<128x32xf32> -> vector<128x32xf32>
    %c1 = arith.constant 1 : index
    %c0_4 = arith.constant 0 : index
    %c0_5 = arith.constant 0 : index
    %9 = vector.load %arg2[%c1, %c0_4, %c0_5] : memref<5x32x32xbf16, #tpu.memory_space<vmem>>, vector<1x32x32xbf16>
    %10 = vector.shape_cast %9 : vector<1x32x32xbf16> to vector<32x32xbf16>
    %cst_6 = arith.constant dense<0.000000e+00> : vector<128x32xf32>
    %11 = tpu.matmul %5, %10, %cst_6 {dimension_numbers = #tpu.dot_dimension_numbers<[1], [0], [0], [1], [0, 0, 1, 1], [], []>} : vector<128x32xbf16>, vector<32x32xbf16>, vector<128x32xf32> -> vector<128x32xf32>
    %c127_i32 = arith.constant 127 : i32
    %12 = tpu.dynamic_rotate %11 by %c127_i32 dim 0 : vector<128x32xf32>, i32 -> vector<128x32xf32>
    %13 = arith.addf %8, %12 : vector<128x32xf32>
    %c2 = arith.constant 2 : index
    %c0_7 = arith.constant 0 : index
    %c0_8 = arith.constant 0 : index
    %14 = vector.load %arg2[%c2, %c0_7, %c0_8] : memref<5x32x32xbf16, #tpu.memory_space<vmem>>, vector<1x32x32xbf16>
    %15 = vector.shape_cast %14 : vector<1x32x32xbf16> to vector<32x32xbf16>
    %cst_9 = arith.constant dense<0.000000e+00> : vector<128x32xf32>
    %16 = tpu.matmul %5, %15, %cst_9 {dimension_numbers = #tpu.dot_dimension_numbers<[1], [0], [0], [1], [0, 0, 1, 1], [], []>} : vector<128x32xbf16>, vector<32x32xbf16>, vector<128x32xf32> -> vector<128x32xf32>
    %c126_i32 = arith.constant 126 : i32
    %17 = tpu.dynamic_rotate %16 by %c126_i32 dim 0 : vector<128x32xf32>, i32 -> vector<128x32xf32>
    %18 = arith.addf %13, %17 : vector<128x32xf32>
    %c3 = arith.constant 3 : index
    %c0_10 = arith.constant 0 : index
    %c0_11 = arith.constant 0 : index
    %19 = vector.load %arg2[%c3, %c0_10, %c0_11] : memref<5x32x32xbf16, #tpu.memory_space<vmem>>, vector<1x32x32xbf16>
    %20 = vector.shape_cast %19 : vector<1x32x32xbf16> to vector<32x32xbf16>
    %cst_12 = arith.constant dense<0.000000e+00> : vector<128x32xf32>
    %21 = tpu.matmul %5, %20, %cst_12 {dimension_numbers = #tpu.dot_dimension_numbers<[1], [0], [0], [1], [0, 0, 1, 1], [], []>} : vector<128x32xbf16>, vector<32x32xbf16>, vector<128x32xf32> -> vector<128x32xf32>
    %c125_i32 = arith.constant 125 : i32
    %22 = tpu.dynamic_rotate %21 by %c125_i32 dim 0 : vector<128x32xf32>, i32 -> vector<128x32xf32>
    %23 = arith.addf %18, %22 : vector<128x32xf32>
    %c4 = arith.constant 4 : index
    %c0_13 = arith.constant 0 : index
    %c0_14 = arith.constant 0 : index
    %24 = vector.load %arg2[%c4, %c0_13, %c0_14] : memref<5x32x32xbf16, #tpu.memory_space<vmem>>, vector<1x32x32xbf16>
    %25 = vector.shape_cast %24 : vector<1x32x32xbf16> to vector<32x32xbf16>
    %cst_15 = arith.constant dense<0.000000e+00> : vector<128x32xf32>
    %26 = tpu.matmul %5, %25, %cst_15 {dimension_numbers = #tpu.dot_dimension_numbers<[1], [0], [0], [1], [0, 0, 1, 1], [], []>} : vector<128x32xbf16>, vector<32x32xbf16>, vector<128x32xf32> -> vector<128x32xf32>
    %c124_i32 = arith.constant 124 : i32
    %27 = tpu.dynamic_rotate %26 by %c124_i32 dim 0 : vector<128x32xf32>, i32 -> vector<128x32xf32>
    %28 = arith.addf %23, %27 : vector<128x32xf32>
    %c0_16 = arith.constant 0 : index
    %c0_17 = arith.constant 0 : index
    %29 = vector.load %arg3[%c0_16, %c0_17] : memref<1x32xf32, #tpu.memory_space<vmem>>, vector<1x32xf32>
    %30 = vector.broadcast %29 : vector<1x32xf32> to vector<128x32xf32>
    %31 = arith.addf %28, %30 : vector<128x32xf32>
    %cst_18 = arith.constant 0.000000e+00 : f32
    %32 = vector.shape_cast %4 : vector<128x1xi1> to vector<128x1xi1>
    %33 = vector.broadcast %32 : vector<128x1xi1> to vector<128x32xi1>
    %34 = vector.broadcast %cst_18 : f32 to vector<128x32xf32>
    %35 = arith.select %33, %31, %34 : vector<128x32xi1>, vector<128x32xf32>
    %cst_19 = arith.constant 0.000000e+00 : f32
    %36 = vector.broadcast %cst_19 : f32 to vector<128x32xf32>
    %37 = arith.maximumf %35, %36 : vector<128x32xf32>
    %38 = arith.truncf %37 : vector<128x32xf32> to vector<128x32xbf16>
    %c0_20 = arith.constant 0 : index
    %c0_21 = arith.constant 0 : index
    %c0_22 = arith.constant 0 : index
    %39 = vector.load %arg4[%c0_20, %c0_21, %c0_22] : memref<3x32x32xbf16, #tpu.memory_space<vmem>>, vector<1x32x32xbf16>
    %40 = vector.shape_cast %39 : vector<1x32x32xbf16> to vector<32x32xbf16>
    %cst_23 = arith.constant dense<0.000000e+00> : vector<128x32xf32>
    %41 = tpu.matmul %38, %40, %cst_23 {dimension_numbers = #tpu.dot_dimension_numbers<[1], [0], [0], [1], [0, 0, 1, 1], [], []>} : vector<128x32xbf16>, vector<32x32xbf16>, vector<128x32xf32> -> vector<128x32xf32>
    %c1_24 = arith.constant 1 : index
    %c0_25 = arith.constant 0 : index
    %c0_26 = arith.constant 0 : index
    %42 = vector.load %arg4[%c1_24, %c0_25, %c0_26] : memref<3x32x32xbf16, #tpu.memory_space<vmem>>, vector<1x32x32xbf16>
    %43 = vector.shape_cast %42 : vector<1x32x32xbf16> to vector<32x32xbf16>
    %cst_27 = arith.constant dense<0.000000e+00> : vector<128x32xf32>
    %44 = tpu.matmul %38, %43, %cst_27 {dimension_numbers = #tpu.dot_dimension_numbers<[1], [0], [0], [1], [0, 0, 1, 1], [], []>} : vector<128x32xbf16>, vector<32x32xbf16>, vector<128x32xf32> -> vector<128x32xf32>
    %c2_28 = arith.constant 2 : index
    %c0_29 = arith.constant 0 : index
    %c0_30 = arith.constant 0 : index
    %45 = vector.load %arg4[%c2_28, %c0_29, %c0_30] : memref<3x32x32xbf16, #tpu.memory_space<vmem>>, vector<1x32x32xbf16>
    %46 = vector.shape_cast %45 : vector<1x32x32xbf16> to vector<32x32xbf16>
    %cst_31 = arith.constant dense<0.000000e+00> : vector<128x32xf32>
    %47 = tpu.matmul %38, %46, %cst_31 {dimension_numbers = #tpu.dot_dimension_numbers<[1], [0], [0], [1], [0, 0, 1, 1], [], []>} : vector<128x32xbf16>, vector<32x32xbf16>, vector<128x32xf32> -> vector<128x32xf32>
    %c1_i32 = arith.constant 1 : i32
    %48 = tpu.dynamic_rotate %41 by %c1_i32 dim 0 : vector<128x32xf32>, i32 -> vector<128x32xf32>
    %49 = arith.addf %48, %44 : vector<128x32xf32>
    %c127_i32_32 = arith.constant 127 : i32
    %50 = tpu.dynamic_rotate %47 by %c127_i32_32 dim 0 : vector<128x32xf32>, i32 -> vector<128x32xf32>
    %51 = arith.addf %49, %50 : vector<128x32xf32>
    %c0_33 = arith.constant 0 : index
    %c0_34 = arith.constant 0 : index
    %52 = vector.load %arg5[%c0_33, %c0_34] : memref<1x32xf32, #tpu.memory_space<vmem>>, vector<1x32xf32>
    %53 = vector.broadcast %52 : vector<1x32xf32> to vector<128x32xf32>
    %54 = arith.addf %51, %53 : vector<128x32xf32>
    %cst_35 = arith.constant 0xFF800000 : f32
    %55 = vector.shape_cast %4 : vector<128x1xi1> to vector<128x1xi1>
    %56 = vector.broadcast %55 : vector<128x1xi1> to vector<128x32xi1>
    %57 = vector.broadcast %cst_35 : f32 to vector<128x32xf32>
    %58 = arith.select %56, %54, %57 : vector<128x32xi1>, vector<128x32xf32>
    %59 = vector.shape_cast %58 : vector<128x32xf32> to vector<8x16x32xf32>
    %cst_36 = arith.constant dense<0xFF800000> : vector<8x32xf32>
    %60 = vector.multi_reduction <maximumf>, %59, %cst_36 [1] : vector<8x16x32xf32> to vector<8x32xf32>
    %cst_37 = arith.constant 0.000000e+00 : f32
    %61 = vector.broadcast %cst_37 : f32 to vector<8x32xf32>
    %62 = arith.maximumf %60, %61 : vector<8x32xf32>
    %c0_38 = arith.constant 0 : index
    %c0_39 = arith.constant 0 : index
    %63 = vector.load %arg6[%c0_38, %c0_39] : memref<8x32xf32, #tpu.memory_space<vmem>>, vector<8x32xf32>
    tpu.vector_store %arg6[%c0_38, %c0_39], %62 {strides = array<i32>} : memref<8x32xf32, #tpu.memory_space<vmem>>, vector<8x32xf32>,
    return
  }
  func.func @transform_0(%arg0: i32) -> (i32, i32) {
    %c0_i32 = arith.constant 0 : i32
    %c0_i32_0 = arith.constant 0 : i32
    return %arg0, %c0_i32 : i32, i32
  }
  func.func @transform_1(%arg0: i32) -> (i32, i32, i32) {
    %c0_i32 = arith.constant 0 : i32
    %c0_i32_0 = arith.constant 0 : i32
    %c0_i32_1 = arith.constant 0 : i32
    %c0_i32_2 = arith.constant 0 : i32
    return %c0_i32, %c0_i32_0, %c0_i32_1 : i32, i32, i32
  }
  func.func @transform_2(%arg0: i32) -> (i32, i32) {
    %c0_i32 = arith.constant 0 : i32
    %c0_i32_0 = arith.constant 0 : i32
    %c0_i32_1 = arith.constant 0 : i32
    return %c0_i32, %c0_i32_0 : i32, i32
  }
  func.func @transform_3(%arg0: i32) -> (i32, i32, i32) {
    %c0_i32 = arith.constant 0 : i32
    %c0_i32_0 = arith.constant 0 : i32
    %c0_i32_1 = arith.constant 0 : i32
    %c0_i32_2 = arith.constant 0 : i32
    return %c0_i32, %c0_i32_0, %c0_i32_1 : i32, i32, i32
  }
  func.func @transform_4(%arg0: i32) -> (i32, i32) {
    %c0_i32 = arith.constant 0 : i32
    %c0_i32_0 = arith.constant 0 : i32
    %c0_i32_1 = arith.constant 0 : i32
    return %c0_i32, %c0_i32_0 : i32, i32
  }
  func.func @transform_5(%arg0: i32) -> (i32, i32) {
    %c0_i32 = arith.constant 0 : i32
    %c0_i32_0 = arith.constant 0 : i32
    return %arg0, %c0_i32 : i32, i32
  }
}

</mosaic_0001>

<llo_original>
// kernel: tpu_custom_call.1
$region0: #{tpu_custom_call.1}
  #allocation0 [shape = 'u32[]', space=smem, size = 0x4, offset = 0x4, fixed_abs, tag = 'smem constant byte address 0x4 - core index']
  #allocation1 [shape = 'u32[72,128]{1,0:T(1,128)}', space=vmem, size = 0x9000, scoped, tag = 'internal scratch']
  %s0 = inlined_call_operand.vmem [shape: bf16[256,32], index: 0, kind: input, shape index: {}]
  %s1 = inlined_call_operand.vmem [shape: bf16[5,32,32], index: 1, kind: input, shape index: {}]
  %s2 = inlined_call_operand.vmem [shape: f32[1,32], index: 2, kind: input, shape index: {}]
  %s3 = inlined_call_operand.vmem [shape: bf16[3,32,32], index: 3, kind: input, shape index: {}]
  %s4 = inlined_call_operand.vmem [shape: f32[1,32], index: 4, kind: input, shape index: {}]
  %s5 = inlined_call_operand.hbm [shape: f32[16,32], index: 5, kind: output, shape index: {}]
  %s6 = sld [smem:[#allocation0]]
  $region53: #{tpu_custom_call.1} parent=0
    _
  %s8 = ssub.s32 1, %s6
  %s9 = scalar_select 0, %s8, %s6
  $region1: #{tpu_custom_call.1} parent=0
    #allocation2 [shape = 'u8[8192]{0}', space=vmem, size = 0x2000, scoped, tag = 'output window, operand 0']
    #allocation3 [shape = 's32[2]{0}', space=sflag, size = 0x8, scoped, tag = 'scoped memory for tpu_custom_call.1']
    %10 = vsyncpa [#allocation3], 0
    %s11 = scalar_lea.sflag [#allocation3], 1
    %12 = vsyncpa %s11, 0
    loop: start=0, step=1, limit=4
    $region2: #{tpu_custom_call.1} parent=1 // loop_pre_header
      _
    $region3: #{tpu_custom_call.1} parent=1 // loop_header
      %s14 = sphi 0, %s18
      %p15 = scmp.ge.s32.totalorder %s14, 4
      %s24 = sphi 0, %s26
      %s27 = sphi 0, %s24
      %s28 = sphi 0, %s27
      %s44 = sphi 0, %s28
      %s48 = sphi 0, %s48
      %s50 = sphi 0, %s48
      %s51 = sphi 0, %s50
      %s65 = sphi 0, %s51
      %s69 = sphi 0, %s69
      %s71 = sphi 0, %s69
      %s72 = sphi 0, %s71
      %s86 = sphi 0, %s72
      %s90 = sphi 0, %s90
      %s92 = sphi 0, %s90
      %s93 = sphi 0, %s92
      %s107 = sphi 0, %s93
      %s111 = sphi 0, %s111
      %s113 = sphi 0, %s111
      %s114 = sphi 0, %s113
      %s128 = sphi 0, %s114
      %s134 = sphi 0, %s136
      %s137 = sphi 0, %s134
      %s138 = sphi 0, %s137
      %s154 = sphi 0, %s138
    $region4: #{tpu_custom_call.1} parent=1 // loop_header_branch
      %17 = sbr.rel (%p15) target = $region8
    $region5: #{tpu_custom_call.1} parent=1 // loop_body
      %s19 = ssub.s32 %s14, 1
      %s20 = ssub.s32 %s14, 2
      %s21 = sadd.s32 %s14, 1
      %s22 = ssub.s32 %s14, %s21
      %p23 = scmp.eq.s32.totalorder %s22, 0
      %s25 = sadd.s32 %s24, 1
      %s26 = scalar_select %p23, %s24, %s25
      %p29 = pneg %p23
      %p30 = scmp.eq.s32.totalorder %s14, 1
      %p31 = por %p29, %p30
      %p32 = scmp.ne.s32.totalorder %s24, %s27
      %p33 = scmp.eq.s32.totalorder %s14, 0
      %p34 = por %p32, %p33
      %p35 = scmp.ne.s32.totalorder %s24, %s27
      %p36 = scmp.eq.s32.totalorder %s19, 1
      %p37 = por %p35, %p36
      %p38 = scmp.ne.s32.totalorder %s27, %s28
      %p39 = scmp.eq.s32.totalorder %s19, 0
      %p40 = por %p38, %p39
      %p41 = scmp.ne.s32.totalorder %s27, %s28
      %p42 = scmp.eq.s32.totalorder %s20, 1
      %p43 = por %p41, %p42
      %p45 = scmp.ne.s32.totalorder %s28, %s44
      %p46 = scmp.eq.s32.totalorder %s20, 0
      %p47 = por %p45, %p46
      %s49 = sadd.s32 %s48, 1
      %p52 = scmp.eq.s32.totalorder %s14, 1
      %p53 = scmp.ne.s32.totalorder %s48, %s50
      %p54 = scmp.eq.s32.totalorder %s14, 0
      %p55 = por %p53, %p54
      %p56 = scmp.ne.s32.totalorder %s48, %s50
      %p57 = scmp.eq.s32.totalorder %s19, 1
      %p58 = por %p56, %p57
      %p59 = scmp.ne.s32.totalorder %s50, %s51
      %p60 = scmp.eq.s32.totalorder %s19, 0
      %p61 = por %p59, %p60
      %p62 = scmp.ne.s32.totalorder %s50, %s51
      %p63 = scmp.eq.s32.totalorder %s20, 1
      %p64 = por %p62, %p63
      %p66 = scmp.ne.s32.totalorder %s51, %s65
      %p67 = scmp.eq.s32.totalorder %s20, 0
      %p68 = por %p66, %p67
      %s70 = sadd.s32 %s69, 1
      %p73 = scmp.eq.s32.totalorder %s14, 1
      %p74 = scmp.ne.s32.totalorder %s69, %s71
      %p75 = scmp.eq.s32.totalorder %s14, 0
      %p76 = por %p74, %p75
      %p77 = scmp.ne.s32.totalorder %s69, %s71
      %p78 = scmp.eq.s32.totalorder %s19, 1
      %p79 = por %p77, %p78
      %p80 = scmp.ne.s32.totalorder %s71, %s72
      %p81 = scmp.eq.s32.totalorder %s19, 0
      %p82 = por %p80, %p81
      %p83 = scmp.ne.s32.totalorder %s71, %s72
      %p84 = scmp.eq.s32.totalorder %s20, 1
      %p85 = por %p83, %p84
      %p87 = scmp.ne.s32.totalorder %s72, %s86
      %p88 = scmp.eq.s32.totalorder %s20, 0
      %p89 = por %p87, %p88
      %s91 = sadd.s32 %s90, 1
      %p94 = scmp.eq.s32.totalorder %s14, 1
      %p95 = scmp.ne.s32.totalorder %s90, %s92
      %p96 = scmp.eq.s32.totalorder %s14, 0
      %p97 = por %p95, %p96
      %p98 = scmp.ne.s32.totalorder %s90, %s92
      %p99 = scmp.eq.s32.totalorder %s19, 1
      %p100 = por %p98, %p99
      %p101 = scmp.ne.s32.totalorder %s92, %s93
      %p102 = scmp.eq.s32.totalorder %s19, 0
      %p103 = por %p101, %p102
      %p104 = scmp.ne.s32.totalorder %s92, %s93
      %p105 = scmp.eq.s32.totalorder %s20, 1
      %p106 = por %p104, %p105
      %p108 = scmp.ne.s32.totalorder %s93, %s107
      %p109 = scmp.eq.s32.totalorder %s20, 0
      %p110 = por %p108, %p109
      %s112 = sadd.s32 %s111, 1
      %p115 = scmp.eq.s32.totalorder %s14, 1
      %p116 = scmp.ne.s32.totalorder %s111, %s113
      %p117 = scmp.eq.s32.totalorder %s14, 0
      %p118 = por %p116, %p117
      %p119 = scmp.ne.s32.totalorder %s111, %s113
      %p120 = scmp.eq.s32.totalorder %s19, 1
      %p121 = por %p119, %p120
      %p122 = scmp.ne.s32.totalorder %s113, %s114
      %p123 = scmp.eq.s32.totalorder %s19, 0
      %p124 = por %p122, %p123
      %p125 = scmp.ne.s32.totalorder %s113, %s114
      %p126 = scmp.eq.s32.totalorder %s20, 1
      %p127 = por %p125, %p126
      %p129 = scmp.ne.s32.totalorder %s114, %s128
      %p130 = scmp.eq.s32.totalorder %s20, 0
      %p131 = por %p129, %p130
      %s132 = ssub.s32 %s14, %s21
      %p133 = scmp.eq.s32.totalorder %s132, 0
      %s135 = sadd.s32 %s134, 1
      %s136 = scalar_select %p133, %s134, %s135
      %p139 = pneg %p133
      %p140 = scmp.eq.s32.totalorder %s14, 1
      %p141 = por %p139, %p140
      %p142 = scmp.ne.s32.totalorder %s134, %s137
      %p143 = scmp.eq.s32.totalorder %s14, 0
      %p144 = por %p142, %p143
      %p145 = scmp.ne.s32.totalorder %s134, %s137
      %p146 = scmp.eq.s32.totalorder %s19, 1
      %p147 = por %p145, %p146
      %p148 = scmp.ne.s32.totalorder %s137, %s138
      %p149 = scmp.eq.s32.totalorder %s19, 0
      %p150 = por %p148, %p149
      %p151 = scmp.ne.s32.totalorder %s137, %s138
      %p152 = scmp.eq.s32.totalorder %s20, 1
      %p153 = por %p151, %p152
      %p155 = scmp.ne.s32.totalorder %s138, %s154
      %p156 = scmp.eq.s32.totalorder %s20, 0
      %p157 = por %p155, %p156
      %p158 = scmp.le.s32.totalorder 1, %s14
      %p159 = scmp.lt.s32.totalorder %s14, 3
      %p160 = pnand %p158, %p159
      %p161 = pneg %p160
      // Predicated region
      $region9: #{tpu_custom_call.1} parent=5 // pred_check
        _
      $region10: #{tpu_custom_call.1} parent=5 // pred_check_branch
        %163 = sbr.rel (%p160) target = $region12
      $region11: #{tpu_custom_call.1} parent=5 // pred_region
        %s164 = ssub.s32 %s14, 1
        // Predicated region
        $region13: #{tpu_custom_call.1} parent=11 // pred_check
          %p165 = pneg %p61
        $region14: #{tpu_custom_call.1} parent=11 // pred_check_branch
          %167 = sbr.rel (%p165) target = $region16
        $region15: #{tpu_custom_call.1} parent=11 // pred_region
          _
        $region16: #{tpu_custom_call.1} parent=11 // pred_fallthru
          _
        // Predicated region
        $region17: #{tpu_custom_call.1} parent=11 // pred_check
          %p168 = pneg %p82
        $region18: #{tpu_custom_call.1} parent=11 // pred_check_branch
          %170 = sbr.rel (%p168) target = $region20
        $region19: #{tpu_custom_call.1} parent=11 // pred_region
          _
        $region20: #{tpu_custom_call.1} parent=11 // pred_fallthru
          _
        // Predicated region
        $region21: #{tpu_custom_call.1} parent=11 // pred_check
          %p171 = pneg %p103
        $region22: #{tpu_custom_call.1} parent=11 // pred_check_branch
          %173 = sbr.rel (%p171) target = $region24
        $region23: #{tpu_custom_call.1} parent=11 // pred_region
          _
        $region24: #{tpu_custom_call.1} parent=11 // pred_fallthru
          _
        // Predicated region
        $region25: #{tpu_custom_call.1} parent=11 // pred_check
          %p174 = pneg %p124
        $region26: #{tpu_custom_call.1} parent=11 // pred_check_branch
          %176 = sbr.rel (%p174) target = $region28
        $region27: #{tpu_custom_call.1} parent=11 // pred_region
          _
        $region28: #{tpu_custom_call.1} parent=11 // pred_fallthru
          _
      $region12: #{tpu_custom_call.1} parent=5 // pred_fallthru
        _
      %p177 = scmp.lt.s32.totalorder %s14, 2
      // Predicated region
      $region29: #{tpu_custom_call.1} parent=5 // pred_check
        %p178 = pneg %p177
      $region30: #{tpu_custom_call.1} parent=5 // pred_check_branch
        %180 = sbr.rel (%p178) target = $region32
      $region31: #{tpu_custom_call.1} parent=5 // pred_region
        // Predicated region
        $region33: #{tpu_custom_call.1} parent=31 // pred_check
          %p181 = pneg %p34
        $region34: #{tpu_custom_call.1} parent=31 // pred_check_branch
          %183 = sbr.rel (%p181) target = $region36
        $region35: #{tpu_custom_call.1} parent=31 // pred_region
          %s184 = smul.u32 16, %s14
          %p185 = scmp.lt.s32.totalorder %s184, 31
          %s186 = scalar_select %p185, %s184, 31
          %s187 = smul.addr %s186, 4
          %s188 = scalar_lea.vmem %s0, %s187
          %s189 = smul.u32 16, %s14
        $region36: #{tpu_custom_call.1} parent=31 // pred_fallthru
          _
      $region32: #{tpu_custom_call.1} parent=5 // pred_fallthru
        _
      %p190 = scmp.le.s32.totalorder 1, %s14
      %p191 = scmp.lt.s32.totalorder %s14, 3
      %p192 = pnand %p190, %p191
      %p193 = pneg %p192
      // Predicated region
      $region37: #{tpu_custom_call.1} parent=5 // pred_check
        _
      $region38: #{tpu_custom_call.1} parent=5 // pred_check_branch
        %195 = sbr.rel (%p192) target = $region40
      $region39: #{tpu_custom_call.1} parent=5 // pred_region
        %s196 = ssub.s32 %s14, 1
        %s197 = smul.u32 16, %s19
        %p198 = scmp.lt.s32.totalorder %s197, 31
        %s199 = scalar_select %p198, %s197, 31
        %s200 = smul.addr %s199, 4
        %s201 = scalar_lea.vmem %s0, %s200
        %p202 = pneg %p40
        %p203 = pneg %p37
        %p204 = pneg %p61
        %p205 = pneg %p58
        %p206 = pneg %p82
        %p207 = pneg %p79
        %p208 = pneg %p103
        %p209 = pneg %p100
        %p210 = pneg %p124
        %p211 = pneg %p121
        %p212 = pneg %p150
        %p213 = pneg %p147
        %s214 = sand.u32 %s137, 1
        %s215 = scalar_lea.sflag [#allocation3], %s214
        %s216 = sand.u32 %s137, 1
        %s217 = smul.addr %s216, 8
        %s218 = scalar_lea.vmem [#allocation2], %s217
        %s219 = smul.u32 16, %s19
        %p220 = scmp.lt.s32.totalorder %s219, 31
        %s221 = scalar_select %p220, %s219, 31
        %s222 = smul.addr %s221, 4
        %s223 = scalar_lea.vmem %s0, %s222
        %s224 = smul.u32 16, %s19
        %v226 = vlaneseq
        %v227 = vshrl.u32 %v226, 7
        %v228 = vadd.s32 %v227, 8
        %v229 = vadd.s32 %v227, 16
        %v230 = vadd.s32 %v227, 24
        %v231 = vadd.s32 %v227, 32
        %v232 = vadd.s32 %v227, 40
        %v233 = vadd.s32 %v227, 48
        %v234 = vadd.s32 %v227, 56
        %v235 = vadd.s32 %v227, 64
        %v236 = vadd.s32 %v227, 72
        %v237 = vadd.s32 %v227, 80
        %v238 = vadd.s32 %v227, 88
        %v239 = vadd.s32 %v227, 96
        %v240 = vadd.s32 %v227, 104
        %v241 = vadd.s32 %v227, 112
        %v242 = vadd.s32 %v227, 120
        %v243 = vand.u32 %v227, 15
        %v244 = vand.u32 %v228, 15
        %v245 = vand.u32 %v229, 15
        %v246 = vand.u32 %v230, 15
        %v247 = vand.u32 %v231, 15
        %v248 = vand.u32 %v232, 15
        %v249 = vand.u32 %v233, 15
        %v250 = vand.u32 %v234, 15
        %v251 = vand.u32 %v235, 15
        %v252 = vand.u32 %v236, 15
        %v253 = vand.u32 %v237, 15
        %v254 = vand.u32 %v238, 15
        %v255 = vand.u32 %v239, 15
        %v256 = vand.u32 %v240, 15
        %v257 = vand.u32 %v241, 15
        %v258 = vand.u32 %v242, 15
        %vm259 = vcmp.lt.s32.totalorder %v243, 8
        %vm260 = vcmp.lt.s32.totalorder %v244, 8
        %vm261 = vcmp.lt.s32.totalorder %v245, 8
        %vm262 = vcmp.lt.s32.totalorder %v246, 8
        %vm263 = vcmp.lt.s32.totalorder %v247, 8
        %vm264 = vcmp.lt.s32.totalorder %v248, 8
        %vm265 = vcmp.lt.s32.totalorder %v249, 8
        %vm266 = vcmp.lt.s32.totalorder %v250, 8
        %vm267 = vcmp.lt.s32.totalorder %v251, 8
        %vm268 = vcmp.lt.s32.totalorder %v252, 8
        %vm269 = vcmp.lt.s32.totalorder %v253, 8
        %vm270 = vcmp.lt.s32.totalorder %v254, 8
        %vm271 = vcmp.lt.s32.totalorder %v255, 8
        %vm272 = vcmp.lt.s32.totalorder %v256, 8
        %vm273 = vcmp.lt.s32.totalorder %v257, 8
        %vm274 = vcmp.lt.s32.totalorder %v258, 8
        %v275 = vld [vmem:[%s223] sm:$0xf]
        %v276 = vld [vmem:[%s223 + $0x4] sm:$0xf]
        %v277 = vld [vmem:[%s223 + $0x8] sm:$0xf]
        %v278 = vld [vmem:[%s223 + $0xc] sm:$0xf]
        %v279 = vld [vmem:[%s223 + $0x10] sm:$0xf]
        %v280 = vld [vmem:[%s223 + $0x14] sm:$0xf]
        %v281 = vld [vmem:[%s223 + $0x18] sm:$0xf]
        %v282 = vld [vmem:[%s223 + $0x1c] sm:$0xf]
        %v283 = vld [vmem:[%s223 + $0x20] sm:$0xf]
        %v284 = vld [vmem:[%s223 + $0x24] sm:$0xf]
        %v285 = vld [vmem:[%s223 + $0x28] sm:$0xf]
        %v286 = vld [vmem:[%s223 + $0x2c] sm:$0xf]
        %v287 = vld [vmem:[%s223 + $0x30] sm:$0xf]
        %v288 = vld [vmem:[%s223 + $0x34] sm:$0xf]
        %v289 = vld [vmem:[%s223 + $0x38] sm:$0xf]
        %v290 = vld [vmem:[%s223 + $0x3c] sm:$0xf]
        %v291 = vld [vmem:[%s1] sm:$0xf]
        %v292 = vld [vmem:[%s1 + $0x4] sm:$0xf]
        %v293 = vld [vmem:[%s1 + $0x8] sm:$0xf]
        %v294 = vld [vmem:[%s1 + $0xc] sm:$0xf]
        %s295 = scalar_lea.vmem %s1, 16
        %v296 = vld [vmem:[%s295] sm:$0xf]
        %v297 = vld [vmem:[%s295 + $0x4] sm:$0xf]
        %v298 = vld [vmem:[%s295 + $0x8] sm:$0xf]
        %v299 = vld [vmem:[%s295 + $0xc] sm:$0xf]
        %v316 = vunpack.c.l.b16 %v275
        %v317 = vunpack.c.l.b16 %v276
        %v318 = vunpack.c.l.b16 %v277
        %v319 = vunpack.c.l.b16 %v278
        %v320 = vunpack.c.l.b16 %v279
        %v321 = vunpack.c.l.b16 %v280
        %v322 = vunpack.c.l.b16 %v281
        %v323 = vunpack.c.l.b16 %v282
        %v324 = vunpack.c.l.b16 %v283
        %v325 = vunpack.c.l.b16 %v284
        %v326 = vunpack.c.l.b16 %v285
        %v327 = vunpack.c.l.b16 %v286
        %v328 = vunpack.c.l.b16 %v287
        %v329 = vunpack.c.l.b16 %v288
        %v330 = vunpack.c.l.b16 %v289
        %v331 = vunpack.c.l.b16 %v290
        %v332 = vpack.c.b16 %v317, %v316
        %v333 = vpack.c.b16 %v319, %v318
        %v334 = vpack.c.b16 %v321, %v320
        %v335 = vpack.c.b16 %v323, %v322
        %v336 = vpack.c.b16 %v325, %v324
        %v337 = vpack.c.b16 %v327, %v326
        %v338 = vpack.c.b16 %v329, %v328
        %v339 = vpack.c.b16 %v331, %v330
        %v344 = vunpack.c.l.b16 %v296
        %v345 = vunpack.c.l.b16 %v297
        %v346 = vunpack.c.l.b16 %v298
        %v347 = vunpack.c.l.b16 %v299
        %v348 = vpack.c.b16 %v345, %v344
        %v349 = vpack.c.b16 %v347, %v346
        %vm352 = vcmask 261120
        %v354 = vsel %vm352, %v332, 0
        %v357 = vsel %vm352, %v333, 0
        %v360 = vsel %vm352, %v334, 0
        %v363 = vsel %vm352, %v335, 0
        %v366 = vsel %vm352, %v336, 0
        %v369 = vsel %vm352, %v337, 0
        %v372 = vsel %vm352, %v338, 0
        %v375 = vsel %vm352, %v339, 0
        %377 = vmatpush.bf16.msra.mxu0 0
        %378 = vmatpush.bf16.msra.mxu0 0
        %379 = vmatpush.bf16.msra.mxu0 0
        %380 = vmatpush.bf16.msra.mxu0 0
        %381 = vmatpush.bf16.msra.mxu0 0
        %382 = vmatpush.bf16.msra.mxu0 0
        %383 = vmatpush.bf16.msra.mxu0 %v349
        %384 = vmatpush.bf16.msra.mxu0 %v348
        %385 = vmatmul.bf16.gmra.mxu0 %v354
        %v386 = vpop.f32.mrf.mxu0
        %v387 = vadd.f32 0.0, %v386
        %v388 = vpop.f32.mrf.mxu0
        %v389 = vadd.f32 0.0, %v388
        %390 = vmatmul.bf16.gmra.mxu0 %v357
        %v391 = vpop.f32.mrf.mxu0
        %v392 = vadd.f32 0.0, %v391
        %v393 = vpop.f32.mrf.mxu0
        %v394 = vadd.f32 0.0, %v393
        %395 = vmatmul.bf16.gmra.mxu0 %v360
        %v396 = vpop.f32.mrf.mxu0
        %v397 = vadd.f32 0.0, %v396
        %v398 = vpop.f32.mrf.mxu0
        %v399 = vadd.f32 0.0, %v398
        %400 = vmatmul.bf16.gmra.mxu0 %v363
        %v401 = vpop.f32.mrf.mxu0
        %v402 = vadd.f32 0.0, %v401
        %v403 = vpop.f32.mrf.mxu0
        %v404 = vadd.f32 0.0, %v403
        %405 = vmatmul.bf16.gmra.mxu0 %v366
        %v406 = vpop.f32.mrf.mxu0
        %v407 = vadd.f32 0.0, %v406
        %v408 = vpop.f32.mrf.mxu0
        %v409 = vadd.f32 0.0, %v408
        %410 = vmatmul.bf16.gmra.mxu0 %v369
        %v411 = vpop.f32.mrf.mxu0
        %v412 = vadd.f32 0.0, %v411
        %v413 = vpop.f32.mrf.mxu0
        %v414 = vadd.f32 0.0, %v413
        %415 = vmatmul.bf16.gmra.mxu0 %v372
        %v416 = vpop.f32.mrf.mxu0
        %v417 = vadd.f32 0.0, %v416
        %v418 = vpop.f32.mrf.mxu0
        %v419 = vadd.f32 0.0, %v418
        %420 = vmatmul.bf16.gmra.mxu0 %v375
        %v421 = vpop.f32.mrf.mxu0
        %v422 = vadd.f32 0.0, %v421
        %v423 = vpop.f32.mrf.mxu0
        %v424 = vadd.f32 0.0, %v423
        %425 = vdwg.mxu0
        %v426 = vrot.slane %v387, 1
        %v427 = vrot.slane %v389, 1
        %v428 = vrot.slane %v392, 1
        %v429 = vrot.slane %v394, 1
        %v430 = vrot.slane %v397, 1
        %v431 = vrot.slane %v399, 1
        %v432 = vrot.slane %v402, 1
        %v433 = vrot.slane %v404, 1
        %v434 = vrot.slane %v407, 1
        %v435 = vrot.slane %v409, 1
        %v436 = vrot.slane %v412, 1
        %v437 = vrot.slane %v414, 1
        %v438 = vrot.slane %v417, 1
        %v439 = vrot.slane %v419, 1
        %v440 = vrot.slane %v422, 1
        %v441 = vrot.slane %v424, 1
        %vm442 = vcmp.lt.s32.totalorder %v227, 7
        %v443 = vsel %vm442, %v440, %v441
        %v444 = vsel %vm442, %v439, %v440
        %v445 = vsel %vm442, %v438, %v439
        %v446 = vsel %vm442, %v437, %v438
        %v447 = vsel %vm442, %v436, %v437
        %v448 = vsel %vm442, %v435, %v436
        %v449 = vsel %vm442, %v434, %v435
        %v450 = vsel %vm442, %v433, %v434
        %v451 = vsel %vm442, %v432, %v433
        %v452 = vsel %vm442, %v431, %v432
        %v453 = vsel %vm442, %v430, %v431
        %v454 = vsel %vm442, %v429, %v430
        %v455 = vsel %vm442, %v428, %v429
        %v456 = vsel %vm442, %v427, %v428
        %v457 = vsel %vm442, %v426, %v427
        %v458 = vsel %vm442, %v441, %v426
        %v463 = vunpack.c.l.b16 %v291
        %v464 = vunpack.c.l.b16 %v292
        %v465 = vunpack.c.l.b16 %v293
        %v466 = vunpack.c.l.b16 %v294
        %v467 = vpack.c.b16 %v464, %v463
        %v468 = vpack.c.b16 %v466, %v465
        %471 = vmatpush.bf16.msra.mxu0 0
        %472 = vmatpush.bf16.msra.mxu0 0
        %473 = vmatpush.bf16.msra.mxu0 0
        %474 = vmatpush.bf16.msra.mxu0 0
        %475 = vmatpush.bf16.msra.mxu0 0
        %476 = vmatpush.bf16.msra.mxu0 0
        %477 = vmatpush.bf16.msra.mxu0 %v468
        %478 = vmatpush.bf16.msra.mxu0 %v467
        %479 = vmatmul.bf16.gmra.mxu0 %v354
        %v480 = vpop.f32.mrf.mxu0
        %v481 = vadd.f32 %v457, %v480
        %v482 = vpop.f32.mrf.mxu0
        %v483 = vadd.f32 %v456, %v482
        %484 = vmatmul.bf16.gmra.mxu0 %v357
        %v485 = vpop.f32.mrf.mxu0
        %v486 = vadd.f32 %v455, %v485
        %v487 = vpop.f32.mrf.mxu0
        %v488 = vadd.f32 %v454, %v487
        %489 = vmatmul.bf16.gmra.mxu0 %v360
        %v490 = vpop.f32.mrf.mxu0
        %v491 = vadd.f32 %v453, %v490
        %v492 = vpop.f32.mrf.mxu0
        %v493 = vadd.f32 %v452, %v492
        %494 = vmatmul.bf16.gmra.mxu0 %v363
        %v495 = vpop.f32.mrf.mxu0
        %v496 = vadd.f32 %v451, %v495
        %v497 = vpop.f32.mrf.mxu0
        %v498 = vadd.f32 %v450, %v497
        %499 = vmatmul.bf16.gmra.mxu0 %v366
        %v500 = vpop.f32.mrf.mxu0
        %v501 = vadd.f32 %v449, %v500
        %v502 = vpop.f32.mrf.mxu0
        %v503 = vadd.f32 %v448, %v502
        %504 = vmatmul.bf16.gmra.mxu0 %v369
        %v505 = vpop.f32.mrf.mxu0
        %v506 = vadd.f32 %v447, %v505
        %v507 = vpop.f32.mrf.mxu0
        %v508 = vadd.f32 %v446, %v507
        %509 = vmatmul.bf16.gmra.mxu0 %v372
        %v510 = vpop.f32.mrf.mxu0
        %v511 = vadd.f32 %v445, %v510
        %v512 = vpop.f32.mrf.mxu0
        %v513 = vadd.f32 %v444, %v512
        %514 = vmatmul.bf16.gmra.mxu0 %v375
        %v515 = vpop.f32.mrf.mxu0
        %v516 = vadd.f32 %v443, %v515
        %v517 = vpop.f32.mrf.mxu0
        %v518 = vadd.f32 %v458, %v517
        %519 = vdwg.mxu0
        %s520 = scalar_lea.vmem %s1, 32
        %v521 = vld [vmem:[%s520] sm:$0xf]
        %v522 = vld [vmem:[%s520 + $0x4] sm:$0xf]
        %v523 = vld [vmem:[%s520 + $0x8] sm:$0xf]
        %v524 = vld [vmem:[%s520 + $0xc] sm:$0xf]
        %v529 = vunpack.c.l.b16 %v521
        %v530 = vunpack.c.l.b16 %v522
        %v531 = vunpack.c.l.b16 %v523
        %v532 = vunpack.c.l.b16 %v524
        %v533 = vpack.c.b16 %v530, %v529
        %v534 = vpack.c.b16 %v532, %v531
        %537 = vmatpush.bf16.msra.mxu0 0
        %538 = vmatpush.bf16.msra.mxu0 0
        %539 = vmatpush.bf16.msra.mxu0 0
        %540 = vmatpush.bf16.msra.mxu0 0
        %541 = vmatpush.bf16.msra.mxu0 0
        %542 = vmatpush.bf16.msra.mxu0 0
        %543 = vmatpush.bf16.msra.mxu0 %v534
        %544 = vmatpush.bf16.msra.mxu0 %v533
        %545 = vmatmul.bf16.gmra.mxu0 %v354
        %v546 = vpop.f32.mrf.mxu0
        %v547 = vadd.f32 0.0, %v546
        %v548 = vpop.f32.mrf.mxu0
        %v549 = vadd.f32 0.0, %v548
        %550 = vmatmul.bf16.gmra.mxu0 %v357
        %v551 = vpop.f32.mrf.mxu0
        %v552 = vadd.f32 0.0, %v551
        %v553 = vpop.f32.mrf.mxu0
        %v554 = vadd.f32 0.0, %v553
        %555 = vmatmul.bf16.gmra.mxu0 %v360
        %v556 = vpop.f32.mrf.mxu0
        %v557 = vadd.f32 0.0, %v556
        %v558 = vpop.f32.mrf.mxu0
        %v559 = vadd.f32 0.0, %v558
        %560 = vmatmul.bf16.gmra.mxu0 %v363
        %v561 = vpop.f32.mrf.mxu0
        %v562 = vadd.f32 0.0, %v561
        %v563 = vpop.f32.mrf.mxu0
        %v564 = vadd.f32 0.0, %v563
        %565 = vmatmul.bf16.gmra.mxu0 %v366
        %v566 = vpop.f32.mrf.mxu0
        %v567 = vadd.f32 0.0, %v566
        %v568 = vpop.f32.mrf.mxu0
        %v569 = vadd.f32 0.0, %v568
        %570 = vmatmul.bf16.gmra.mxu0 %v369
        %v571 = vpop.f32.mrf.mxu0
        %v572 = vadd.f32 0.0, %v571
        %v573 = vpop.f32.mrf.mxu0
        %v574 = vadd.f32 0.0, %v573
        %575 = vmatmul.bf16.gmra.mxu0 %v372
        %v576 = vpop.f32.mrf.mxu0
        %v577 = vadd.f32 0.0, %v576
        %v578 = vpop.f32.mrf.mxu0
        %v579 = vadd.f32 0.0, %v578
        %580 = vmatmul.bf16.gmra.mxu0 %v375
        %v581 = vpop.f32.mrf.mxu0
        %v582 = vadd.f32 0.0, %v581
        %v583 = vpop.f32.mrf.mxu0
        %v584 = vadd.f32 0.0, %v583
        %585 = vdwg.mxu0
        %v586 = vrot.slane %v547, 2
        %v587 = vrot.slane %v549, 2
        %v588 = vrot.slane %v552, 2
        %v589 = vrot.slane %v554, 2
        %v590 = vrot.slane %v557, 2
        %v591 = vrot.slane %v559, 2
        %v592 = vrot.slane %v562, 2
        %v593 = vrot.slane %v564, 2
        %v594 = vrot.slane %v567, 2
        %v595 = vrot.slane %v569, 2
        %v596 = vrot.slane %v572, 2
        %v597 = vrot.slane %v574, 2
        %v598 = vrot.slane %v577, 2
        %v599 = vrot.slane %v579, 2
        %v600 = vrot.slane %v582, 2
        %v601 = vrot.slane %v584, 2
        %vm602 = vcmp.lt.s32.totalorder %v227, 6
        %v603 = vsel %vm602, %v600, %v601
        %v604 = vsel %vm602, %v599, %v600
        %v605 = vsel %vm602, %v598, %v599
        %v606 = vsel %vm602, %v597, %v598
        %v607 = vsel %vm602, %v596, %v597
        %v608 = vsel %vm602, %v595, %v596
        %v609 = vsel %vm602, %v594, %v595
        %v610 = vsel %vm602, %v593, %v594
        %v611 = vsel %vm602, %v592, %v593
        %v612 = vsel %vm602, %v591, %v592
        %v613 = vsel %vm602, %v590, %v591
        %v614 = vsel %vm602, %v589, %v590
        %v615 = vsel %vm602, %v588, %v589
        %v616 = vsel %vm602, %v587, %v588
        %v617 = vsel %vm602, %v586, %v587
        %v618 = vsel %vm602, %v601, %v586
        %v619 = vadd.f32 %v481, %v617
        %v620 = vadd.f32 %v483, %v616
        %v621 = vadd.f32 %v486, %v615
        %v622 = vadd.f32 %v488, %v614
        %v623 = vadd.f32 %v491, %v613
        %v624 = vadd.f32 %v493, %v612
        %v625 = vadd.f32 %v496, %v611
        %v626 = vadd.f32 %v498, %v610
        %v627 = vadd.f32 %v501, %v609
        %v628 = vadd.f32 %v503, %v608
        %v629 = vadd.f32 %v506, %v607
        %v630 = vadd.f32 %v508, %v606
        %v631 = vadd.f32 %v511, %v605
        %v632 = vadd.f32 %v513, %v604
        %v633 = vadd.f32 %v516, %v603
        %v634 = vadd.f32 %v518, %v618
        %s635 = scalar_lea.vmem %s1, 48
        %v636 = vld [vmem:[%s635] sm:$0xf]
        %v637 = vld [vmem:[%s635 + $0x4] sm:$0xf]
        %v638 = vld [vmem:[%s635 + $0x8] sm:$0xf]
        %v639 = vld [vmem:[%s635 + $0xc] sm:$0xf]
        %v644 = vunpack.c.l.b16 %v636
        %v645 = vunpack.c.l.b16 %v637
        %v646 = vunpack.c.l.b16 %v638
        %v647 = vunpack.c.l.b16 %v639
        %v648 = vpack.c.b16 %v645, %v644
        %v649 = vpack.c.b16 %v647, %v646
        %652 = vmatpush.bf16.msra.mxu0 0
        %653 = vmatpush.bf16.msra.mxu0 0
        %654 = vmatpush.bf16.msra.mxu0 0
        %655 = vmatpush.bf16.msra.mxu0 0
        %656 = vmatpush.bf16.msra.mxu0 0
        %657 = vmatpush.bf16.msra.mxu0 0
        %658 = vmatpush.bf16.msra.mxu0 %v649
        %659 = vmatpush.bf16.msra.mxu0 %v648
        %660 = vmatmul.bf16.gmra.mxu0 %v354
        %v661 = vpop.f32.mrf.mxu0
        %v662 = vadd.f32 0.0, %v661
        %v663 = vpop.f32.mrf.mxu0
        %v664 = vadd.f32 0.0, %v663
        %665 = vmatmul.bf16.gmra.mxu0 %v357
        %v666 = vpop.f32.mrf.mxu0
        %v667 = vadd.f32 0.0, %v666
        %v668 = vpop.f32.mrf.mxu0
        %v669 = vadd.f32 0.0, %v668
        %670 = vmatmul.bf16.gmra.mxu0 %v360
        %v671 = vpop.f32.mrf.mxu0
        %v672 = vadd.f32 0.0, %v671
        %v673 = vpop.f32.mrf.mxu0
        %v674 = vadd.f32 0.0, %v673
        %675 = vmatmul.bf16.gmra.mxu0 %v363
        %v676 = vpop.f32.mrf.mxu0
        %v677 = vadd.f32 0.0, %v676
        %v678 = vpop.f32.mrf.mxu0
        %v679 = vadd.f32 0.0, %v678
        %680 = vmatmul.bf16.gmra.mxu0 %v366
        %v681 = vpop.f32.mrf.mxu0
        %v682 = vadd.f32 0.0, %v681
        %v683 = vpop.f32.mrf.mxu0
        %v684 = vadd.f32 0.0, %v683
        %685 = vmatmul.bf16.gmra.mxu0 %v369
        %v686 = vpop.f32.mrf.mxu0
        %v687 = vadd.f32 0.0, %v686
        %v688 = vpop.f32.mrf.mxu0
        %v689 = vadd.f32 0.0, %v688
        %690 = vmatmul.bf16.gmra.mxu0 %v372
        %v691 = vpop.f32.mrf.mxu0
        %v692 = vadd.f32 0.0, %v691
        %v693 = vpop.f32.mrf.mxu0
        %v694 = vadd.f32 0.0, %v693
        %695 = vmatmul.bf16.gmra.mxu0 %v375
        %v696 = vpop.f32.mrf.mxu0
        %v697 = vadd.f32 0.0, %v696
        %v698 = vpop.f32.mrf.mxu0
        %v699 = vadd.f32 0.0, %v698
        %700 = vdwg.mxu0
        %v701 = vrot.slane %v662, 3
        %v702 = vrot.slane %v664, 3
        %v703 = vrot.slane %v667, 3
        %v704 = vrot.slane %v669, 3
        %v705 = vrot.slane %v672, 3
        %v706 = vrot.slane %v674, 3
        %v707 = vrot.slane %v677, 3
        %v708 = vrot.slane %v679, 3
        %v709 = vrot.slane %v682, 3
        %v710 = vrot.slane %v684, 3
        %v711 = vrot.slane %v687, 3
        %v712 = vrot.slane %v689, 3
        %v713 = vrot.slane %v692, 3
        %v714 = vrot.slane %v694, 3
        %v715 = vrot.slane %v697, 3
        %v716 = vrot.slane %v699, 3
        %vm717 = vcmp.lt.s32.totalorder %v227, 5
        %v718 = vsel %vm717, %v715, %v716
        %v719 = vsel %vm717, %v714, %v715
        %v720 = vsel %vm717, %v713, %v714
        %v721 = vsel %vm717, %v712, %v713
        %v722 = vsel %vm717, %v711, %v712
        %v723 = vsel %vm717, %v710, %v711
        %v724 = vsel %vm717, %v709, %v710
        %v725 = vsel %vm717, %v708, %v709
        %v726 = vsel %vm717, %v707, %v708
        %v727 = vsel %vm717, %v706, %v707
        %v728 = vsel %vm717, %v705, %v706
        %v729 = vsel %vm717, %v704, %v705
        %v730 = vsel %vm717, %v703, %v704
        %v731 = vsel %vm717, %v702, %v703
        %v732 = vsel %vm717, %v701, %v702
        %v733 = vsel %vm717, %v716, %v701
        %v734 = vadd.f32 %v619, %v732
        %v735 = vadd.f32 %v620, %v731
        %v736 = vadd.f32 %v621, %v730
        %v737 = vadd.f32 %v622, %v729
        %v738 = vadd.f32 %v623, %v728
        %v739 = vadd.f32 %v624, %v727
        %v740 = vadd.f32 %v625, %v726
        %v741 = vadd.f32 %v626, %v725
        %v742 = vadd.f32 %v627, %v724
        %v743 = vadd.f32 %v628, %v723
        %v744 = vadd.f32 %v629, %v722
        %v745 = vadd.f32 %v630, %v721
        %v746 = vadd.f32 %v631, %v720
        %v747 = vadd.f32 %v632, %v719
        %v748 = vadd.f32 %v633, %v718
        %v749 = vadd.f32 %v634, %v733
        %s750 = scalar_lea.vmem %s1, 64
        %v751 = vld [vmem:[%s750] sm:$0xf]
        %v752 = vld [vmem:[%s750 + $0x4] sm:$0xf]
        %v753 = vld [vmem:[%s750 + $0x8] sm:$0xf]
        %v754 = vld [vmem:[%s750 + $0xc] sm:$0xf]
        %v759 = vunpack.c.l.b16 %v751
        %v760 = vunpack.c.l.b16 %v752
        %v761 = vunpack.c.l.b16 %v753
        %v762 = vunpack.c.l.b16 %v754
        %v763 = vpack.c.b16 %v760, %v759
        %v764 = vpack.c.b16 %v762, %v761
        %767 = vmatpush.bf16.msra.mxu0 0
        %768 = vmatpush.bf16.msra.mxu0 0
        %769 = vmatpush.bf16.msra.mxu0 0
        %770 = vmatpush.bf16.msra.mxu0 0
        %771 = vmatpush.bf16.msra.mxu0 0
        %772 = vmatpush.bf16.msra.mxu0 0
        %773 = vmatpush.bf16.msra.mxu0 %v764
        %774 = vmatpush.bf16.msra.mxu0 %v763
        %775 = vmatmul.bf16.gmra.mxu0 %v354
        %v776 = vpop.f32.mrf.mxu0
        %v777 = vadd.f32 0.0, %v776
        %v778 = vpop.f32.mrf.mxu0
        %v779 = vadd.f32 0.0, %v778
        %780 = vmatmul.bf16.gmra.mxu0 %v357
        %v781 = vpop.f32.mrf.mxu0
        %v782 = vadd.f32 0.0, %v781
        %v783 = vpop.f32.mrf.mxu0
        %v784 = vadd.f32 0.0, %v783
        %785 = vmatmul.bf16.gmra.mxu0 %v360
        %v786 = vpop.f32.mrf.mxu0
        %v787 = vadd.f32 0.0, %v786
        %v788 = vpop.f32.mrf.mxu0
        %v789 = vadd.f32 0.0, %v788
        %790 = vmatmul.bf16.gmra.mxu0 %v363
        %v791 = vpop.f32.mrf.mxu0
        %v792 = vadd.f32 0.0, %v791
        %v793 = vpop.f32.mrf.mxu0
        %v794 = vadd.f32 0.0, %v793
        %795 = vmatmul.bf16.gmra.mxu0 %v366
        %v796 = vpop.f32.mrf.mxu0
        %v797 = vadd.f32 0.0, %v796
        %v798 = vpop.f32.mrf.mxu0
        %v799 = vadd.f32 0.0, %v798
        %800 = vmatmul.bf16.gmra.mxu0 %v369
        %v801 = vpop.f32.mrf.mxu0
        %v802 = vadd.f32 0.0, %v801
        %v803 = vpop.f32.mrf.mxu0
        %v804 = vadd.f32 0.0, %v803
        %805 = vmatmul.bf16.gmra.mxu0 %v372
        %v806 = vpop.f32.mrf.mxu0
        %v807 = vadd.f32 0.0, %v806
        %v808 = vpop.f32.mrf.mxu0
        %v809 = vadd.f32 0.0, %v808
        %810 = vmatmul.bf16.gmra.mxu0 %v375
        %v811 = vpop.f32.mrf.mxu0
        %v812 = vadd.f32 0.0, %v811
        %v813 = vpop.f32.mrf.mxu0
        %v814 = vadd.f32 0.0, %v813
        %815 = vdwg.mxu0
        %v816 = vrot.slane %v777, 4
        %v817 = vrot.slane %v779, 4
        %v818 = vrot.slane %v782, 4
        %v819 = vrot.slane %v784, 4
        %v820 = vrot.slane %v787, 4
        %v821 = vrot.slane %v789, 4
        %v822 = vrot.slane %v792, 4
        %v823 = vrot.slane %v794, 4
        %v824 = vrot.slane %v797, 4
        %v825 = vrot.slane %v799, 4
        %v826 = vrot.slane %v802, 4
        %v827 = vrot.slane %v804, 4
        %v828 = vrot.slane %v807, 4
        %v829 = vrot.slane %v809, 4
        %v830 = vrot.slane %v812, 4
        %v831 = vrot.slane %v814, 4
        %vm832 = vcmp.lt.s32.totalorder %v227, 4
        %v833 = vsel %vm832, %v830, %v831
        %v834 = vsel %vm832, %v829, %v830
        %v835 = vsel %vm832, %v828, %v829
        %v836 = vsel %vm832, %v827, %v828
        %v837 = vsel %vm832, %v826, %v827
        %v838 = vsel %vm832, %v825, %v826
        %v839 = vsel %vm832, %v824, %v825
        %v840 = vsel %vm832, %v823, %v824
        %v841 = vsel %vm832, %v822, %v823
        %v842 = vsel %vm832, %v821, %v822
        %v843 = vsel %vm832, %v820, %v821
        %v844 = vsel %vm832, %v819, %v820
        %v845 = vsel %vm832, %v818, %v819
        %v846 = vsel %vm832, %v817, %v818
        %v847 = vsel %vm832, %v816, %v817
        %v848 = vsel %vm832, %v831, %v816
        %v849 = vadd.f32 %v734, %v847
        %v850 = vadd.f32 %v735, %v846
        %v851 = vadd.f32 %v736, %v845
        %v852 = vadd.f32 %v737, %v844
        %v853 = vadd.f32 %v738, %v843
        %v854 = vadd.f32 %v739, %v842
        %v855 = vadd.f32 %v740, %v841
        %v856 = vadd.f32 %v741, %v840
        %v857 = vadd.f32 %v742, %v839
        %v858 = vadd.f32 %v743, %v838
        %v859 = vadd.f32 %v744, %v837
        %v860 = vadd.f32 %v745, %v836
        %v861 = vadd.f32 %v746, %v835
        %v862 = vadd.f32 %v747, %v834
        %v863 = vadd.f32 %v748, %v833
        %v864 = vadd.f32 %v749, %v848
        %v865 = vld [vmem:[%s2] sm:$0x1]
        %v867 = vperm.slane %v865, 0
        %v869 = vadd.f32 %v849, %v867
        %v870 = vadd.f32 %v850, %v867
        %v871 = vadd.f32 %v851, %v867
        %v872 = vadd.f32 %v852, %v867
        %v873 = vadd.f32 %v853, %v867
        %v874 = vadd.f32 %v854, %v867
        %v875 = vadd.f32 %v855, %v867
        %v876 = vadd.f32 %v856, %v867
        %v877 = vadd.f32 %v857, %v867
        %v878 = vadd.f32 %v858, %v867
        %v879 = vadd.f32 %v859, %v867
        %v880 = vadd.f32 %v860, %v867
        %v881 = vadd.f32 %v861, %v867
        %v882 = vadd.f32 %v862, %v867
        %v883 = vadd.f32 %v863, %v867
        %v884 = vadd.f32 %v864, %v867
        %v885 = vsel %vm259, 1, 0
        %v886 = vsel %vm260, 1, 0
        %v887 = vsel %vm261, 1, 0
        %v888 = vsel %vm262, 1, 0
        %v889 = vsel %vm263, 1, 0
        %v890 = vsel %vm264, 1, 0
        %v891 = vsel %vm265, 1, 0
        %v892 = vsel %vm266, 1, 0
        %v893 = vsel %vm267, 1, 0
        %v894 = vsel %vm268, 1, 0
        %v895 = vsel %vm269, 1, 0
        %v896 = vsel %vm270, 1, 0
        %v897 = vsel %vm271, 1, 0
        %v898 = vsel %vm272, 1, 0
        %v899 = vsel %vm273, 1, 0
        %v900 = vsel %vm274, 1, 0
        %vm901 = vcmp.eq.s32.totalorder %v885, 1
        %vm902 = vcmp.eq.s32.totalorder %v886, 1
        %vm903 = vcmp.eq.s32.totalorder %v887, 1
        %vm904 = vcmp.eq.s32.totalorder %v888, 1
        %vm905 = vcmp.eq.s32.totalorder %v889, 1
        %vm906 = vcmp.eq.s32.totalorder %v890, 1
        %vm907 = vcmp.eq.s32.totalorder %v891, 1
        %vm908 = vcmp.eq.s32.totalorder %v892, 1
        %vm909 = vcmp.eq.s32.totalorder %v893, 1
        %vm910 = vcmp.eq.s32.totalorder %v894, 1
        %vm911 = vcmp.eq.s32.totalorder %v895, 1
        %vm912 = vcmp.eq.s32.totalorder %v896, 1
        %vm913 = vcmp.eq.s32.totalorder %v897, 1
        %vm914 = vcmp.eq.s32.totalorder %v898, 1
        %vm915 = vcmp.eq.s32.totalorder %v899, 1
        %vm916 = vcmp.eq.s32.totalorder %v900, 1
        %v917 = vsel %vm901, %v869, 0.0
        %v918 = vsel %vm902, %v870, 0.0
        %v919 = vsel %vm903, %v871, 0.0
        %v920 = vsel %vm904, %v872, 0.0
        %v921 = vsel %vm905, %v873, 0.0
        %v922 = vsel %vm906, %v874, 0.0
        %v923 = vsel %vm907, %v875, 0.0
        %v924 = vsel %vm908, %v876, 0.0
        %v925 = vsel %vm909, %v877, 0.0
        %v926 = vsel %vm910, %v878, 0.0
        %v927 = vsel %vm911, %v879, 0.0
        %v928 = vsel %vm912, %v880, 0.0
        %v929 = vsel %vm913, %v881, 0.0
        %v930 = vsel %vm914, %v882, 0.0
        %v931 = vsel %vm915, %v883, 0.0
        %v932 = vsel %vm916, %v884, 0.0
        %v933 = vmax.f32 %v917, 0.0
        %v934 = vmax.f32 %v918, 0.0
        %v935 = vmax.f32 %v919, 0.0
        %v936 = vmax.f32 %v920, 0.0
        %v937 = vmax.f32 %v921, 0.0
        %v938 = vmax.f32 %v922, 0.0
        %v939 = vmax.f32 %v923, 0.0
        %v940 = vmax.f32 %v924, 0.0
        %v941 = vmax.f32 %v925, 0.0
        %v942 = vmax.f32 %v926, 0.0
        %v943 = vmax.f32 %v927, 0.0
        %v944 = vmax.f32 %v928, 0.0
        %v945 = vmax.f32 %v929, 0.0
        %v946 = vmax.f32 %v930, 0.0
        %v947 = vmax.f32 %v931, 0.0
        %v948 = vmax.f32 %v932, 0.0
        %v949 = vpack.c.bf16 %v934, %v933
        %v950 = vpack.c.bf16 %v936, %v935
        %v951 = vpack.c.bf16 %v938, %v937
        %v952 = vpack.c.bf16 %v940, %v939
        %v953 = vpack.c.bf16 %v942, %v941
        %v954 = vpack.c.bf16 %v944, %v943
        %v955 = vpack.c.bf16 %v946, %v945
        %v956 = vpack.c.bf16 %v948, %v947
        %v957 = vld [vmem:[%s3] sm:$0xf]
        %v958 = vld [vmem:[%s3 + $0x4] sm:$0xf]
        %v959 = vld [vmem:[%s3 + $0x8] sm:$0xf]
        %v960 = vld [vmem:[%s3 + $0xc] sm:$0xf]
        %v965 = vunpack.c.l.b16 %v957
        %v966 = vunpack.c.l.b16 %v958
        %v967 = vunpack.c.l.b16 %v959
        %v968 = vunpack.c.l.b16 %v960
        %v969 = vpack.c.b16 %v966, %v965
        %v970 = vpack.c.b16 %v968, %v967
        %v974 = vsel %vm352, %v949, 0
        %v977 = vsel %vm352, %v950, 0
        %v980 = vsel %vm352, %v951, 0
        %v983 = vsel %vm352, %v952, 0
        %v986 = vsel %vm352, %v953, 0
        %v989 = vsel %vm352, %v954, 0
        %v992 = vsel %vm352, %v955, 0
        %v995 = vsel %vm352, %v956, 0
        %997 = vmatpush.bf16.msra.mxu0 0
        %998 = vmatpush.bf16.msra.mxu0 0
        %999 = vmatpush.bf16.msra.mxu0 0
        %1000 = vmatpush.bf16.msra.mxu0 0
        %1001 = vmatpush.bf16.msra.mxu0 0
        %1002 = vmatpush.bf16.msra.mxu0 0
        %1003 = vmatpush.bf16.msra.mxu0 %v970
        %1004 = vmatpush.bf16.msra.mxu0 %v969
        %1005 = vmatmul.bf16.gmra.mxu0 %v974
        %v1006 = vpop.f32.mrf.mxu0
        %v1007 = vadd.f32 0.0, %v1006
        %v1008 = vpop.f32.mrf.mxu0
        %v1009 = vadd.f32 0.0, %v1008
        %1010 = vmatmul.bf16.gmra.mxu0 %v977
        %v1011 = vpop.f32.mrf.mxu0
        %v1012 = vadd.f32 0.0, %v1011
        %v1013 = vpop.f32.mrf.mxu0
        %v1014 = vadd.f32 0.0, %v1013
        %1015 = vmatmul.bf16.gmra.mxu0 %v980
        %v1016 = vpop.f32.mrf.mxu0
        %v1017 = vadd.f32 0.0, %v1016
        %v1018 = vpop.f32.mrf.mxu0
        %v1019 = vadd.f32 0.0, %v1018
        %1020 = vmatmul.bf16.gmra.mxu0 %v983
        %v1021 = vpop.f32.mrf.mxu0
        %v1022 = vadd.f32 0.0, %v1021
        %v1023 = vpop.f32.mrf.mxu0
        %v1024 = vadd.f32 0.0, %v1023
        %1025 = vmatmul.bf16.gmra.mxu0 %v986
        %v1026 = vpop.f32.mrf.mxu0
        %v1027 = vadd.f32 0.0, %v1026
        %v1028 = vpop.f32.mrf.mxu0
        %v1029 = vadd.f32 0.0, %v1028
        %1030 = vmatmul.bf16.gmra.mxu0 %v989
        %v1031 = vpop.f32.mrf.mxu0
        %v1032 = vadd.f32 0.0, %v1031
        %v1033 = vpop.f32.mrf.mxu0
        %v1034 = vadd.f32 0.0, %v1033
        %1035 = vmatmul.bf16.gmra.mxu0 %v992
        %v1036 = vpop.f32.mrf.mxu0
        %v1037 = vadd.f32 0.0, %v1036
        %v1038 = vpop.f32.mrf.mxu0
        %v1039 = vadd.f32 0.0, %v1038
        %1040 = vmatmul.bf16.gmra.mxu0 %v995
        %v1041 = vpop.f32.mrf.mxu0
        %v1042 = vadd.f32 0.0, %v1041
        %v1043 = vpop.f32.mrf.mxu0
        %v1044 = vadd.f32 0.0, %v1043
        %1045 = vdwg.mxu0
        %s1046 = scalar_lea.vmem %s3, 16
        %v1047 = vld [vmem:[%s1046] sm:$0xf]
        %v1048 = vld [vmem:[%s1046 + $0x4] sm:$0xf]
        %v1049 = vld [vmem:[%s1046 + $0x8] sm:$0xf]
        %v1050 = vld [vmem:[%s1046 + $0xc] sm:$0xf]
        %v1055 = vunpack.c.l.b16 %v1047
        %v1056 = vunpack.c.l.b16 %v1048
        %v1057 = vunpack.c.l.b16 %v1049
        %v1058 = vunpack.c.l.b16 %v1050
        %v1059 = vpack.c.b16 %v1056, %v1055
        %v1060 = vpack.c.b16 %v1058, %v1057
        %1063 = vmatpush.bf16.msra.mxu0 0
        %1064 = vmatpush.bf16.msra.mxu0 0
        %1065 = vmatpush.bf16.msra.mxu0 0
        %1066 = vmatpush.bf16.msra.mxu0 0
        %1067 = vmatpush.bf16.msra.mxu0 0
        %1068 = vmatpush.bf16.msra.mxu0 0
        %1069 = vmatpush.bf16.msra.mxu0 %v1060
        %1070 = vmatpush.bf16.msra.mxu0 %v1059
        %1071 = vmatmul.bf16.gmra.mxu0 %v974
        %v1072 = vpop.f32.mrf.mxu0
        %v1073 = vadd.f32 0.0, %v1072
        %v1074 = vpop.f32.mrf.mxu0
        %v1075 = vadd.f32 0.0, %v1074
        %1076 = vmatmul.bf16.gmra.mxu0 %v977
        %v1077 = vpop.f32.mrf.mxu0
        %v1078 = vadd.f32 0.0, %v1077
        %v1079 = vpop.f32.mrf.mxu0
        %v1080 = vadd.f32 0.0, %v1079
        %1081 = vmatmul.bf16.gmra.mxu0 %v980
        %v1082 = vpop.f32.mrf.mxu0
        %v1083 = vadd.f32 0.0, %v1082
        %v1084 = vpop.f32.mrf.mxu0
        %v1085 = vadd.f32 0.0, %v1084
        %1086 = vmatmul.bf16.gmra.mxu0 %v983
        %v1087 = vpop.f32.mrf.mxu0
        %v1088 = vadd.f32 0.0, %v1087
        %v1089 = vpop.f32.mrf.mxu0
        %v1090 = vadd.f32 0.0, %v1089
        %1091 = vmatmul.bf16.gmra.mxu0 %v986
        %v1092 = vpop.f32.mrf.mxu0
        %v1093 = vadd.f32 0.0, %v1092
        %v1094 = vpop.f32.mrf.mxu0
        %v1095 = vadd.f32 0.0, %v1094
        %1096 = vmatmul.bf16.gmra.mxu0 %v989
        %v1097 = vpop.f32.mrf.mxu0
        %v1098 = vadd.f32 0.0, %v1097
        %v1099 = vpop.f32.mrf.mxu0
        %v1100 = vadd.f32 0.0, %v1099
        %1101 = vmatmul.bf16.gmra.mxu0 %v992
        %v1102 = vpop.f32.mrf.mxu0
        %v1103 = vadd.f32 0.0, %v1102
        %v1104 = vpop.f32.mrf.mxu0
        %v1105 = vadd.f32 0.0, %v1104
        %1106 = vmatmul.bf16.gmra.mxu0 %v995
        %v1107 = vpop.f32.mrf.mxu0
        %v1108 = vadd.f32 0.0, %v1107
        %v1109 = vpop.f32.mrf.mxu0
        %v1110 = vadd.f32 0.0, %v1109
        %1111 = vdwg.mxu0
        %s1112 = scalar_lea.vmem %s3, 32
        %v1113 = vld [vmem:[%s1112] sm:$0xf]
        %v1114 = vld [vmem:[%s1112 + $0x4] sm:$0xf]
        %v1115 = vld [vmem:[%s1112 + $0x8] sm:$0xf]
        %v1116 = vld [vmem:[%s1112 + $0xc] sm:$0xf]
        %v1121 = vunpack.c.l.b16 %v1113
        %v1122 = vunpack.c.l.b16 %v1114
        %v1123 = vunpack.c.l.b16 %v1115
        %v1124 = vunpack.c.l.b16 %v1116
        %v1125 = vpack.c.b16 %v1122, %v1121
        %v1126 = vpack.c.b16 %v1124, %v1123
        %1129 = vmatpush.bf16.msra.mxu0 0
        %1130 = vmatpush.bf16.msra.mxu0 0
        %1131 = vmatpush.bf16.msra.mxu0 0
        %1132 = vmatpush.bf16.msra.mxu0 0
        %1133 = vmatpush.bf16.msra.mxu0 0
        %1134 = vmatpush.bf16.msra.mxu0 0
        %1135 = vmatpush.bf16.msra.mxu0 %v1126
        %1136 = vmatpush.bf16.msra.mxu0 %v1125
        %1137 = vmatmul.bf16.gmra.mxu0 %v974
        %v1138 = vpop.f32.mrf.mxu0
        %v1139 = vadd.f32 0.0, %v1138
        %v1140 = vpop.f32.mrf.mxu0
        %v1141 = vadd.f32 0.0, %v1140
        %1142 = vmatmul.bf16.gmra.mxu0 %v977
        %v1143 = vpop.f32.mrf.mxu0
        %v1144 = vadd.f32 0.0, %v1143
        %v1145 = vpop.f32.mrf.mxu0
        %v1146 = vadd.f32 0.0, %v1145
        %1147 = vmatmul.bf16.gmra.mxu0 %v980
        %v1148 = vpop.f32.mrf.mxu0
        %v1149 = vadd.f32 0.0, %v1148
        %v1150 = vpop.f32.mrf.mxu0
        %v1151 = vadd.f32 0.0, %v1150
        %1152 = vmatmul.bf16.gmra.mxu0 %v983
        %v1153 = vpop.f32.mrf.mxu0
        %v1154 = vadd.f32 0.0, %v1153
        %v1155 = vpop.f32.mrf.mxu0
        %v1156 = vadd.f32 0.0, %v1155
        %1157 = vmatmul.bf16.gmra.mxu0 %v986
        %v1158 = vpop.f32.mrf.mxu0
        %v1159 = vadd.f32 0.0, %v1158
        %v1160 = vpop.f32.mrf.mxu0
        %v1161 = vadd.f32 0.0, %v1160
        %1162 = vmatmul.bf16.gmra.mxu0 %v989
        %v1163 = vpop.f32.mrf.mxu0
        %v1164 = vadd.f32 0.0, %v1163
        %v1165 = vpop.f32.mrf.mxu0
        %v1166 = vadd.f32 0.0, %v1165
        %1167 = vmatmul.bf16.gmra.mxu0 %v992
        %v1168 = vpop.f32.mrf.mxu0
        %v1169 = vadd.f32 0.0, %v1168
        %v1170 = vpop.f32.mrf.mxu0
        %v1171 = vadd.f32 0.0, %v1170
        %1172 = vmatmul.bf16.gmra.mxu0 %v995
        %v1173 = vpop.f32.mrf.mxu0
        %v1174 = vadd.f32 0.0, %v1173
        %v1175 = vpop.f32.mrf.mxu0
        %v1176 = vadd.f32 0.0, %v1175
        %1177 = vdwg.mxu0
        %v1178 = vrot.slane %v1007, 7
        %v1179 = vrot.slane %v1009, 7
        %v1180 = vrot.slane %v1012, 7
        %v1181 = vrot.slane %v1014, 7
        %v1182 = vrot.slane %v1017, 7
        %v1183 = vrot.slane %v1019, 7
        %v1184 = vrot.slane %v1022, 7
        %v1185 = vrot.slane %v1024, 7
        %v1186 = vrot.slane %v1027, 7
        %v1187 = vrot.slane %v1029, 7
        %v1188 = vrot.slane %v1032, 7
        %v1189 = vrot.slane %v1034, 7
        %v1190 = vrot.slane %v1037, 7
        %v1191 = vrot.slane %v1039, 7
        %v1192 = vrot.slane %v1042, 7
        %v1193 = vrot.slane %v1044, 7
        %vm1194 = vcmp.lt.s32.totalorder %v227, 1
        %v1195 = vsel %vm1194, %v1192, %v1193
        %v1196 = vsel %vm1194, %v1191, %v1192
        %v1197 = vsel %vm1194, %v1190, %v1191
        %v1198 = vsel %vm1194, %v1189, %v1190
        %v1199 = vsel %vm1194, %v1188, %v1189
        %v1200 = vsel %vm1194, %v1187, %v1188
        %v1201 = vsel %vm1194, %v1186, %v1187
        %v1202 = vsel %vm1194, %v1185, %v1186
        %v1203 = vsel %vm1194, %v1184, %v1185
        %v1204 = vsel %vm1194, %v1183, %v1184
        %v1205 = vsel %vm1194, %v1182, %v1183
        %v1206 = vsel %vm1194, %v1181, %v1182
        %v1207 = vsel %vm1194, %v1180, %v1181
        %v1208 = vsel %vm1194, %v1179, %v1180
        %v1209 = vsel %vm1194, %v1178, %v1179
        %v1210 = vsel %vm1194, %v1193, %v1178
        %v1211 = vadd.f32 %v1210, %v1073
        %v1212 = vadd.f32 %v1209, %v1075
        %v1213 = vadd.f32 %v1208, %v1078
        %v1214 = vadd.f32 %v1207, %v1080
        %v1215 = vadd.f32 %v1206, %v1083
        %v1216 = vadd.f32 %v1205, %v1085
        %v1217 = vadd.f32 %v1204, %v1088
        %v1218 = vadd.f32 %v1203, %v1090
        %v1219 = vadd.f32 %v1202, %v1093
        %v1220 = vadd.f32 %v1201, %v1095
        %v1221 = vadd.f32 %v1200, %v1098
        %v1222 = vadd.f32 %v1199, %v1100
        %v1223 = vadd.f32 %v1198, %v1103
        %v1224 = vadd.f32 %v1197, %v1105
        %v1225 = vadd.f32 %v1196, %v1108
        %v1226 = vadd.f32 %v1195, %v1110
        %v1227 = vrot.slane %v1139, 1
        %v1228 = vrot.slane %v1141, 1
        %v1229 = vrot.slane %v1144, 1
        %v1230 = vrot.slane %v1146, 1
        %v1231 = vrot.slane %v1149, 1
        %v1232 = vrot.slane %v1151, 1
        %v1233 = vrot.slane %v1154, 1
        %v1234 = vrot.slane %v1156, 1
        %v1235 = vrot.slane %v1159, 1
        %v1236 = vrot.slane %v1161, 1
        %v1237 = vrot.slane %v1164, 1
        %v1238 = vrot.slane %v1166, 1
        %v1239 = vrot.slane %v1169, 1
        %v1240 = vrot.slane %v1171, 1
        %v1241 = vrot.slane %v1174, 1
        %v1242 = vrot.slane %v1176, 1
        %v1243 = vsel %vm442, %v1241, %v1242
        %v1244 = vsel %vm442, %v1240, %v1241
        %v1245 = vsel %vm442, %v1239, %v1240
        %v1246 = vsel %vm442, %v1238, %v1239
        %v1247 = vsel %vm442, %v1237, %v1238
        %v1248 = vsel %vm442, %v1236, %v1237
        %v1249 = vsel %vm442, %v1235, %v1236
        %v1250 = vsel %vm442, %v1234, %v1235
        %v1251 = vsel %vm442, %v1233, %v1234
        %v1252 = vsel %vm442, %v1232, %v1233
        %v1253 = vsel %vm442, %v1231, %v1232
        %v1254 = vsel %vm442, %v1230, %v1231
        %v1255 = vsel %vm442, %v1229, %v1230
        %v1256 = vsel %vm442, %v1228, %v1229
        %v1257 = vsel %vm442, %v1227, %v1228
        %v1258 = vsel %vm442, %v1242, %v1227
        %v1259 = vadd.f32 %v1211, %v1257
        %v1260 = vadd.f32 %v1212, %v1256
        %v1261 = vadd.f32 %v1213, %v1255
        %v1262 = vadd.f32 %v1214, %v1254
        %v1263 = vadd.f32 %v1215, %v1253
        %v1264 = vadd.f32 %v1216, %v1252
        %v1265 = vadd.f32 %v1217, %v1251
        %v1266 = vadd.f32 %v1218, %v1250
        %v1267 = vadd.f32 %v1219, %v1249
        %v1268 = vadd.f32 %v1220, %v1248
        %v1269 = vadd.f32 %v1221, %v1247
        %v1270 = vadd.f32 %v1222, %v1246
        %v1271 = vadd.f32 %v1223, %v1245
        %v1272 = vadd.f32 %v1224, %v1244
        %v1273 = vadd.f32 %v1225, %v1243
        %v1274 = vadd.f32 %v1226, %v1258
        %v1275 = vld [vmem:[%s4] sm:$0x1]
        %v1277 = vperm.slane %v1275, 0
        %v1279 = vadd.f32 %v1259, %v1277
        %v1280 = vadd.f32 %v1260, %v1277
        %v1281 = vadd.f32 %v1261, %v1277
        %v1282 = vadd.f32 %v1262, %v1277
        %v1283 = vadd.f32 %v1263, %v1277
        %v1284 = vadd.f32 %v1264, %v1277
        %v1285 = vadd.f32 %v1265, %v1277
        %v1286 = vadd.f32 %v1266, %v1277
        %v1287 = vadd.f32 %v1267, %v1277
        %v1288 = vadd.f32 %v1268, %v1277
        %v1289 = vadd.f32 %v1269, %v1277
        %v1290 = vadd.f32 %v1270, %v1277
        %v1291 = vadd.f32 %v1271, %v1277
        %v1292 = vadd.f32 %v1272, %v1277
        %v1293 = vadd.f32 %v1273, %v1277
        %v1294 = vadd.f32 %v1274, %v1277
        %v1295 = vsel %vm901, %v1279, -inf
        %v1296 = vsel %vm902, %v1280, -inf
        %v1297 = vsel %vm903, %v1281, -inf
        %v1298 = vsel %vm904, %v1282, -inf
        %v1299 = vsel %vm905, %v1283, -inf
        %v1300 = vsel %vm906, %v1284, -inf
        %v1301 = vsel %vm907, %v1285, -inf
        %v1302 = vsel %vm908, %v1286, -inf
        %v1303 = vsel %vm909, %v1287, -inf
        %v1304 = vsel %vm910, %v1288, -inf
        %v1305 = vsel %vm911, %v1289, -inf
        %v1306 = vsel %vm912, %v1290, -inf
        %v1307 = vsel %vm913, %v1291, -inf
        %v1308 = vsel %vm914, %v1292, -inf
        %v1309 = vsel %vm915, %v1293, -inf
        %v1310 = vsel %vm916, %v1294, -inf
        %v1311 = vsel %vm352, %v1295, -inf
        %v1312 = vsel %vm352, %v1296, -inf
        %v1313 = vmax.f32 %v1311, %v1312
        %v1314 = vrot.slane %v1313, 4
        %v1315 = vmax.f32 %v1313, %v1314
        %v1316 = vrot.slane %v1315, 2
        %v1317 = vmax.f32 %v1315, %v1316
        %v1318 = vrot.slane %v1317, 1
        %v1319 = vmax.f32 %v1317, %v1318
        %v1320 = vsel %vm352, %v1297, -inf
        %v1321 = vsel %vm352, %v1298, -inf
        %v1322 = vmax.f32 %v1320, %v1321
        %v1323 = vrot.slane %v1322, 4
        %v1324 = vmax.f32 %v1322, %v1323
        %v1325 = vrot.slane %v1324, 2
        %v1326 = vmax.f32 %v1324, %v1325
        %v1327 = vrot.slane %v1326, 1
        %v1328 = vmax.f32 %v1326, %v1327
        %v1329 = vsel %vm352, %v1299, -inf
        %v1330 = vsel %vm352, %v1300, -inf
        %v1331 = vmax.f32 %v1329, %v1330
        %v1332 = vrot.slane %v1331, 4
        %v1333 = vmax.f32 %v1331, %v1332
        %v1334 = vrot.slane %v1333, 2
        %v1335 = vmax.f32 %v1333, %v1334
        %v1336 = vrot.slane %v1335, 1
        %v1337 = vmax.f32 %v1335, %v1336
        %v1338 = vsel %vm352, %v1301, -inf
        %v1339 = vsel %vm352, %v1302, -inf
        %v1340 = vmax.f32 %v1338, %v1339
        %v1341 = vrot.slane %v1340, 4
        %v1342 = vmax.f32 %v1340, %v1341
        %v1343 = vrot.slane %v1342, 2
        %v1344 = vmax.f32 %v1342, %v1343
        %v1345 = vrot.slane %v1344, 1
        %v1346 = vmax.f32 %v1344, %v1345
        %v1347 = vsel %vm352, %v1303, -inf
        %v1348 = vsel %vm352, %v1304, -inf
        %v1349 = vmax.f32 %v1347, %v1348
        %v1350 = vrot.slane %v1349, 4
        %v1351 = vmax.f32 %v1349, %v1350
        %v1352 = vrot.slane %v1351, 2
        %v1353 = vmax.f32 %v1351, %v1352
        %v1354 = vrot.slane %v1353, 1
        %v1355 = vmax.f32 %v1353, %v1354
        %v1356 = vsel %vm352, %v1305, -inf
        %v1357 = vsel %vm352, %v1306, -inf
        %v1358 = vmax.f32 %v1356, %v1357
        %v1359 = vrot.slane %v1358, 4
        %v1360 = vmax.f32 %v1358, %v1359
        %v1361 = vrot.slane %v1360, 2
        %v1362 = vmax.f32 %v1360, %v1361
        %v1363 = vrot.slane %v1362, 1
        %v1364 = vmax.f32 %v1362, %v1363
        %v1365 = vsel %vm352, %v1307, -inf
        %v1366 = vsel %vm352, %v1308, -inf
        %v1367 = vmax.f32 %v1365, %v1366
        %v1368 = vrot.slane %v1367, 4
        %v1369 = vmax.f32 %v1367, %v1368
        %v1370 = vrot.slane %v1369, 2
        %v1371 = vmax.f32 %v1369, %v1370
        %v1372 = vrot.slane %v1371, 1
        %v1373 = vmax.f32 %v1371, %v1372
        %v1374 = vsel %vm352, %v1309, -inf
        %v1375 = vsel %vm352, %v1310, -inf
        %v1376 = vmax.f32 %v1374, %v1375
        %v1377 = vrot.slane %v1376, 4
        %v1378 = vmax.f32 %v1376, %v1377
        %v1379 = vrot.slane %v1378, 2
        %v1380 = vmax.f32 %v1378, %v1379
        %v1381 = vrot.slane %v1380, 1
        %v1382 = vmax.f32 %v1380, %v1381
        %v1383 = vmax.f32 %v1319, 0.0
        %v1384 = vmax.f32 %v1328, 0.0
        %v1385 = vmax.f32 %v1337, 0.0
        %v1386 = vmax.f32 %v1346, 0.0
        %v1387 = vmax.f32 %v1355, 0.0
        %v1388 = vmax.f32 %v1364, 0.0
        %v1389 = vmax.f32 %v1373, 0.0
        %v1390 = vmax.f32 %v1382, 0.0
        %vm1399 = vcmask 1041409
        %v1400 = vsel %vm1399, %v1384, %v1383
        %vm1401 = vcmask 1042434
        %v1402 = vsel %vm1401, %v1385, %v1400
        %vm1403 = vcmask 1043459
        %v1404 = vsel %vm1403, %v1386, %v1402
        %vm1405 = vcmask 1044484
        %v1406 = vsel %vm1405, %v1387, %v1404
        %vm1407 = vcmask 1045509
        %v1408 = vsel %vm1407, %v1388, %v1406
        %vm1409 = vcmask 1046534
        %v1410 = vsel %vm1409, %v1389, %v1408
        %vm1411 = vcmask 1047559
        %v1412 = vsel %vm1411, %v1390, %v1410
        %1414 = vst.msk [vmem:[%s218] sm:$0xff] %vm352, %v1412
        %s1415 = sand.u32 %s137, 1
        %s1416 = scalar_lea.sflag [#allocation3], %s1415
        %s1417 = sand.u32 %s137, 1
        %s1418 = smul.addr %s1417, 8
        %s1419 = scalar_lea.vmem [#allocation2], %s1418
        // Predicated region
        $region41: #{tpu_custom_call.1} parent=39 // pred_check
          %p1420 = pneg %p147
        $region42: #{tpu_custom_call.1} parent=39 // pred_check_branch
          %1422 = sbr.rel (%p1420) target = $region44
        $region43: #{tpu_custom_call.1} parent=39 // pred_region
          %1424 = vsyncadd %s1416, 0
          %s1425 = smul.addr %s19, 8
          %s1426 = scalar_lea.hbm %s5, %s1425
          %s1428 = sshll.u32 %s1419, 4
          %s1429 = int_to_ptr.vmem [resolvable:$true] %s1428
          %s1430 = sshll.u32 %s1426, 4
          %s1431 = int_to_ptr.hbm [resolvable:$true] %s1430
          %1433 = dma.vmem_to_hbm [thread:$0]  %s1429, 128, %s1431, %s1416
        $region44: #{tpu_custom_call.1} parent=39 // pred_fallthru
          _
      $region40: #{tpu_custom_call.1} parent=5 // pred_fallthru
        _
      %p1434 = scmp.le.s32.totalorder 2, %s14
      // Predicated region
      $region45: #{tpu_custom_call.1} parent=5 // pred_check
        %p1435 = pneg %p1434
      $region46: #{tpu_custom_call.1} parent=5 // pred_check_branch
        %1437 = sbr.rel (%p1435) target = $region48
      $region47: #{tpu_custom_call.1} parent=5 // pred_region
        %s1438 = ssub.s32 %s14, 2
        // Predicated region
        $region49: #{tpu_custom_call.1} parent=47 // pred_check
          %p1439 = pneg %p153
        $region50: #{tpu_custom_call.1} parent=47 // pred_check_branch
          %1441 = sbr.rel (%p1439) target = $region52
        $region51: #{tpu_custom_call.1} parent=47 // pred_region
          %s1442 = sand.u32 %s138, 1
          %s1443 = scalar_lea.sflag [#allocation3], %s1442
          %s1444 = sand.u32 %s138, 1
          %s1445 = smul.addr %s1444, 8
          %s1446 = scalar_lea.vmem [#allocation2], %s1445
          %1448 = dma.done %s1443, 128
        $region52: #{tpu_custom_call.1} parent=47 // pred_fallthru
          _
      $region48: #{tpu_custom_call.1} parent=5 // pred_fallthru
        _
    $region6: #{tpu_custom_call.1} parent=1 // loop_footer
      %s18 = sadd.s32 1, %s14
    $region7: #{tpu_custom_call.1} parent=1 // loop_footer_branch
      %13 = sbr.rel target = $region3
    $region8: #{tpu_custom_call.1} parent=1 // loop_exit
      _
    %1449 = vsyncpa [#allocation3], 1
    %s1450 = scalar_lea.sflag [#allocation3], 1
    %1451 = vsyncpa %s1450, 1

</llo_original>
